<compile_context>
chip_gen: v7x
topology: tpu7x:2x2x1
jax: 0.10.0
libtpu: 0.0.40
codegen_flags: <defaults>
</compile_context>

<pallas_src>
import functools

import jax
import jax.numpy as jnp
from jax import lax
from jax.experimental import pallas as pl
from jax.experimental.pallas import tpu as pltpu

HIDDEN_SIZE = 100
INPUT_SIZE = 1
NUM_LAYERS = 1   # single-layer LSTM
OUTPUT_SIZE = 1

HP = 128   # hidden padded to one full lane tile per gate
OP = 128   # FC output padded to one full lane tile (lane-dense store)
BP = 8     # batch padded to one f32 sublane tile


def lstm_kernel(xproj_ref, wh_ref, wfc_ref, bfc_ref, out_ref):
    """Fused LSTM recurrence + final Linear.

    xproj_ref: (T, Bp, 4*Hp) f32   precomputed x @ W_ih^T + (b_ih + b_hh), gate-padded
    wh_ref:    (Hp, 4*Hp)    bf16  fused hidden->gate weights (transposed, padded)
    wfc_ref:   (Hp, Op)      f32   final Linear weight (transposed, padded)
    bfc_ref:   (1, Op)       f32   final Linear bias (padded)
    out_ref:   (Bp, Op)      f32   lane-dense (Op=128) and sublane-dense (Bp=8)
    """
    T = xproj_ref.shape[0]
    Bp = xproj_ref.shape[1]
    Hp = wh_ref.shape[0]

    def step(t, carry):
        h, c = carry  # (Bp, Hp) f32, vreg-resident across the unrolled steps
        # One fused (Bp,Hp)x(Hp,4*Hp) MXU push per step; bf16 operands, f32 accum.
        # wh_ref[...] is read inside the step so Mosaic can stream it from VMEM
        # per push rather than pinning 128x512 in registers (spill avoidance).
        gates = xproj_ref[t] + jnp.dot(
            h.astype(jnp.bfloat16), wh_ref[...],
            preferred_element_type=jnp.float32)            # (Bp, 4*Hp) f32
        # PyTorch gate order (i, f, g, o); lane-tile-aligned static slices.
        i_g = jax.nn.sigmoid(gates[:, 0 * Hp:1 * Hp])
        f_g = jax.nn.sigmoid(gates[:, 1 * Hp:2 * Hp])
        g_g = jnp.tanh(gates[:, 2 * Hp:3 * Hp])
        o_g = jax.nn.sigmoid(gates[:, 3 * Hp:4 * Hp])
        c_new = f_g * c + i_g * g_g
        h_new = o_g * jnp.tanh(c_new)
        return h_new, c_new

    h0 = jnp.zeros((Bp, Hp), jnp.float32)
    c0 = jnp.zeros((Bp, Hp), jnp.float32)
    # T is static and tiny -> fully unroll so steps can overlap in the scheduler.
    h, _ = lax.fori_loop(0, T, step, (h0, c0), unroll=True)

    # Lane-dense final FC on the last hidden state (padded wfc cols/rows are zero)
    # -> unmasked (8,128) output store.
    out_ref[...] = (jnp.dot(h, wfc_ref[...], preferred_element_type=jnp.float32)
                    + bfc_ref[...])


def init_params(key, input_size, hidden_size, output_size):
    """Deterministic parameter init mimicking PyTorch's U(-1/sqrt(H), 1/sqrt(H))."""
    H, I, O = hidden_size, input_size, output_size
    k = 1.0 / jnp.sqrt(jnp.float32(H))
    keys = jax.random.split(key, 6)
    w_ih = jax.random.uniform(keys[0], (4 * H, I), jnp.float32, -k, k)   # torch weight_ih_l0
    w_hh = jax.random.uniform(keys[1], (4 * H, H), jnp.float32, -k, k)   # torch weight_hh_l0
    b_ih = jax.random.uniform(keys[2], (4 * H,), jnp.float32, -k, k)
    b_hh = jax.random.uniform(keys[3], (4 * H,), jnp.float32, -k, k)
    w_fc = jax.random.uniform(keys[4], (O, H), jnp.float32, -k, k)       # torch fc.weight
    b_fc = jax.random.uniform(keys[5], (O,), jnp.float32, -k, k)
    return dict(w_ih=w_ih, w_hh=w_hh, b_ih=b_ih, b_hh=b_hh, w_fc=w_fc, b_fc=b_fc)


def prepare_weights(params, hp=HP, op=OP):
    """One-time weight padding/fusion (call once, cache the result)."""
    H = params["w_hh"].shape[1]
    I = params["w_ih"].shape[1]
    O = params["w_fc"].shape[0]

    w_ih = params["w_ih"].reshape(4, H, I)                     # (4, H, I)
    w_hh = params["w_hh"].reshape(4, H, H)                     # (4, H, H)
    b = (params["b_ih"] + params["b_hh"]).reshape(4, H)        # (4, H)

    wx_pad = jnp.zeros((I, 4 * hp), jnp.float32)               # (I, 4*Hp)
    wh_pad = jnp.zeros((hp, 4 * hp), jnp.float32)              # (Hp, 4*Hp)
    b_pad = jnp.zeros((4 * hp,), jnp.float32)                  # (4*Hp,)
    for g in range(4):
        wx_pad = wx_pad.at[:, g * hp:g * hp + H].set(w_ih[g].T)
        wh_pad = wh_pad.at[:H, g * hp:g * hp + H].set(w_hh[g].T)
        b_pad = b_pad.at[g * hp:g * hp + H].set(b[g])

    wfc_pad = jnp.zeros((hp, op), jnp.float32).at[:H, :O].set(params["w_fc"].T)
    bfc_pad = jnp.zeros((1, op), jnp.float32).at[:, :O].set(params["b_fc"][None, :])

    return dict(
        wx_pad=wx_pad,                              # (I, 4*Hp)  f32
        b_pad=b_pad,                                # (4*Hp,)    f32
        wh_pad=wh_pad.astype(jnp.bfloat16),         # (Hp, 4*Hp) bf16 (MXU-native)
        wfc_pad=wfc_pad,                            # (Hp, Op)   f32
        bfc_pad=bfc_pad,                            # (1, Op)    f32
    )


@functools.partial(jax.jit, static_argnames=("out_size",))
def lstm_forward_pallas(x, prep, out_size=OUTPUT_SIZE):
    """x: (B, T, I) batch-first float32 -> (B, out_size) float32."""
    B, T, I = x.shape
    Hp = prep["wh_pad"].shape[0]
    Op = prep["wfc_pad"].shape[1]
    Bp = max(BP, ((B + 7) // 8) * 8)   # batch padded to a full f32 sublane tile

    # ---- Hoisted input projection for ALL timesteps (outside the recurrence) ---
    x_tm = jnp.transpose(x, (1, 0, 2)).astype(jnp.float32)          # (T, B, I)
    x_p = jnp.zeros((T, Bp, I), jnp.float32).at[:, :B, :].set(x_tm)
    if I == 1:
        # I=1: broadcast multiply-add, no degenerate (T*B,1)x(1,4Hp) matmul.
        xproj = x_p * prep["wx_pad"][0] + prep["b_pad"]             # (T, Bp, 4*Hp)
    else:
        xproj = (x_p.reshape(T * Bp, I) @ prep["wx_pad"]
                 ).reshape(T, Bp, 4 * Hp) + prep["b_pad"]

    flops = 2 * T * Bp * Hp * (4 * Hp) + 2 * Bp * Hp * Op
    transcendentals = T * Bp * 5 * Hp
    bytes_accessed = (xproj.size * 4 + prep["wh_pad"].size * 2
                      + prep["wfc_pad"].size * 4 + prep["bfc_pad"].size * 4
                      + Bp * Op * 4)

    vmem = pl.BlockSpec(memory_space=pltpu.MemorySpace.VMEM)

    # TODO(synk): for large T, switch to a grid over T (BlockSpec (1, Bp, 4*Hp),
    # h/c in pltpu.VMEM scratch, axis "arbitrary", vmem_limit_bytes set explicitly);
    # on v7x (64 MiB VMEM) that switch point is ~half the T*B threshold of v5e/v6e.
    # TODO(synk): for large B, add a leading "parallel" batch-tile grid axis so
    # v7x's two TensorCores split the batch (no effect on v5e/v6e).
    out = pl.pallas_call(
        lstm_kernel,
        out_shape=jax.ShapeDtypeStruct((Bp, Op), jnp.float32),
        in_specs=[vmem, vmem, vmem, vmem],
        out_specs=vmem,
        cost_estimate=pl.CostEstimate(flops=flops,
                                      transcendentals=transcendentals,
                                      bytes_accessed=bytes_accessed),
    )(xproj, prep["wh_pad"], prep["wfc_pad"], prep["bfc_pad"])

    return out[:B, :out_size]


def lstm_forward_ref(x, params):
    """Pure-JAX f32 reference matching PyTorch nn.LSTM + nn.Linear semantics."""
    B, T, I = x.shape
    H = params["w_hh"].shape[1]
    h = jnp.zeros((B, H), jnp.float32)
    c = jnp.zeros((B, H), jnp.float32)
    for t in range(T):
        g = (x[:, t, :] @ params["w_ih"].T + params["b_ih"]
             + h @ params["w_hh"].T + params["b_hh"])
        i_g, f_g, g_g, o_g = jnp.split(g, 4, axis=-1)
        i_g = jax.nn.sigmoid(i_g)
        f_g = jax.nn.sigmoid(f_g)
        g_g = jnp.tanh(g_g)
        o_g = jax.nn.sigmoid(o_g)
        c = f_g * c + i_g * g_g
        h = o_g * jnp.tanh(c)
    return h @ params["w_fc"].T + params["b_fc"]


if __name__ == "__main__":
    key = jax.random.PRNGKey(0)
    k_param, k_x = jax.random.split(key)

    B, T = 2, 8
    params = init_params(k_param, INPUT_SIZE, HIDDEN_SIZE, OUTPUT_SIZE)
    prep = prepare_weights(params)          # one-time padded/fused weights (cached)
    x = jax.random.normal(k_x, (B, T, INPUT_SIZE), jnp.float32)

    out = lstm_forward_pallas(x, prep)
    out = jax.block_until_ready(out)

    ref = lstm_forward_ref(x, params)
    assert out.shape == (B, OUTPUT_SIZE)
    # Tolerance loosened vs the pure-f32 version because the recurrent matmul
    # operands are bf16 (accumulation and elementwise math remain f32).
    assert bool(jnp.allclose(out, ref, rtol=2e-2, atol=2e-2)), (out, ref)

    print("KERNEL_OK")
</pallas_src>

<mosaic_0001>
module attributes {stable_mosaic.version = 11 : i64} {
  func.func @lstm_kernel(%arg0: memref<8x8x512xf32, #tpu.memory_space<vmem>>, %arg1: memref<128x512xbf16, #tpu.memory_space<vmem>>, %arg2: memref<128x128xf32, #tpu.memory_space<vmem>>, %arg3: memref<1x128xf32, #tpu.memory_space<vmem>>, %arg4: memref<8x128xf32, #tpu.memory_space<vmem>>) attributes {dimension_semantics = [], scalar_prefetch = 0 : i64, scratch_operands = 0 : i64, tpu.core_type = #tpu.core_type<tc>} {
    %cst = arith.constant 0.000000e+00 : f32
    %0 = vector.broadcast %cst : f32 to vector<8x128xf32>
    %cst_0 = arith.constant 0.000000e+00 : f32
    %1 = vector.broadcast %cst_0 : f32 to vector<8x128xf32>
    %c0_i32 = arith.constant 0 : i32
    %2 = arith.index_cast %c0_i32 : i32 to index
    %c0 = arith.constant 0 : index
    %c0_1 = arith.constant 0 : index
    %3 = vector.load %arg0[%2, %c0, %c0_1] : memref<8x8x512xf32, #tpu.memory_space<vmem>>, vector<1x8x512xf32>
    %4 = vector.shape_cast %3 : vector<1x8x512xf32> to vector<8x512xf32>
    %5 = arith.truncf %0 : vector<8x128xf32> to vector<8x128xbf16>
    %c0_2 = arith.constant 0 : index
    %c0_3 = arith.constant 0 : index
    %6 = vector.load %arg1[%c0_2, %c0_3] : memref<128x512xbf16, #tpu.memory_space<vmem>>, vector<128x512xbf16>
    %cst_4 = arith.constant dense<0.000000e+00> : vector<8x512xf32>
    %7 = tpu.matmul %5, %6, %cst_4 {dimension_numbers = #tpu.dot_dimension_numbers<[1], [0], [0], [1], [0, 0, 1, 1], [], []>} : vector<8x128xbf16>, vector<128x512xbf16>, vector<8x512xf32> -> vector<8x512xf32>
    %8 = arith.addf %4, %7 : vector<8x512xf32>
    %9 = vector.extract_strided_slice %8 {offsets = [0, 0], sizes = [8, 128], strides = [1, 1]} : vector<8x512xf32> to vector<8x128xf32>
    %10 = arith.negf %9 : vector<8x128xf32>
    %11 = math.exp %10 : vector<8x128xf32>
    %cst_5 = arith.constant 1.000000e+00 : f32
    %12 = vector.broadcast %cst_5 : f32 to vector<8x128xf32>
    %13 = arith.addf %12, %11 : vector<8x128xf32>
    %14 = arith.divf %12, %13 : vector<8x128xf32>
    %15 = vector.extract_strided_slice %8 {offsets = [0, 128], sizes = [8, 128], strides = [1, 1]} : vector<8x512xf32> to vector<8x128xf32>
    %16 = arith.negf %15 : vector<8x128xf32>
    %17 = math.exp %16 : vector<8x128xf32>
    %cst_6 = arith.constant 1.000000e+00 : f32
    %18 = vector.broadcast %cst_6 : f32 to vector<8x128xf32>
    %19 = arith.addf %18, %17 : vector<8x128xf32>
    %20 = arith.divf %18, %19 : vector<8x128xf32>
    %21 = vector.extract_strided_slice %8 {offsets = [0, 256], sizes = [8, 128], strides = [1, 1]} : vector<8x512xf32> to vector<8x128xf32>
    %22 = math.tanh %21 : vector<8x128xf32>
    %23 = vector.extract_strided_slice %8 {offsets = [0, 384], sizes = [8, 128], strides = [1, 1]} : vector<8x512xf32> to vector<8x128xf32>
    %24 = arith.negf %23 : vector<8x128xf32>
    %25 = math.exp %24 : vector<8x128xf32>
    %cst_7 = arith.constant 1.000000e+00 : f32
    %26 = vector.broadcast %cst_7 : f32 to vector<8x128xf32>
    %27 = arith.addf %26, %25 : vector<8x128xf32>
    %28 = arith.divf %26, %27 : vector<8x128xf32>
    %29 = arith.mulf %20, %1 : vector<8x128xf32>
    %30 = arith.mulf %14, %22 : vector<8x128xf32>
    %31 = arith.addf %29, %30 : vector<8x128xf32>
    %32 = math.tanh %31 : vector<8x128xf32>
    %33 = arith.mulf %28, %32 : vector<8x128xf32>
    %c1_i32 = arith.constant 1 : i32
    %34 = arith.index_cast %c1_i32 : i32 to index
    %c0_8 = arith.constant 0 : index
    %c0_9 = arith.constant 0 : index
    %35 = vector.load %arg0[%34, %c0_8, %c0_9] : memref<8x8x512xf32, #tpu.memory_space<vmem>>, vector<1x8x512xf32>
    %36 = vector.shape_cast %35 : vector<1x8x512xf32> to vector<8x512xf32>
    %37 = arith.truncf %33 : vector<8x128xf32> to vector<8x128xbf16>
    %c0_10 = arith.constant 0 : index
    %c0_11 = arith.constant 0 : index
    %38 = vector.load %arg1[%c0_10, %c0_11] : memref<128x512xbf16, #tpu.memory_space<vmem>>, vector<128x512xbf16>
    %cst_12 = arith.constant dense<0.000000e+00> : vector<8x512xf32>
    %39 = tpu.matmul %37, %38, %cst_12 {dimension_numbers = #tpu.dot_dimension_numbers<[1], [0], [0], [1], [0, 0, 1, 1], [], []>} : vector<8x128xbf16>, vector<128x512xbf16>, vector<8x512xf32> -> vector<8x512xf32>
    %40 = arith.addf %36, %39 : vector<8x512xf32>
    %41 = vector.extract_strided_slice %40 {offsets = [0, 0], sizes = [8, 128], strides = [1, 1]} : vector<8x512xf32> to vector<8x128xf32>
    %42 = arith.negf %41 : vector<8x128xf32>
    %43 = math.exp %42 : vector<8x128xf32>
    %cst_13 = arith.constant 1.000000e+00 : f32
    %44 = vector.broadcast %cst_13 : f32 to vector<8x128xf32>
    %45 = arith.addf %44, %43 : vector<8x128xf32>
    %46 = arith.divf %44, %45 : vector<8x128xf32>
    %47 = vector.extract_strided_slice %40 {offsets = [0, 128], sizes = [8, 128], strides = [1, 1]} : vector<8x512xf32> to vector<8x128xf32>
    %48 = arith.negf %47 : vector<8x128xf32>
    %49 = math.exp %48 : vector<8x128xf32>
    %cst_14 = arith.constant 1.000000e+00 : f32
    %50 = vector.broadcast %cst_14 : f32 to vector<8x128xf32>
    %51 = arith.addf %50, %49 : vector<8x128xf32>
    %52 = arith.divf %50, %51 : vector<8x128xf32>
    %53 = vector.extract_strided_slice %40 {offsets = [0, 256], sizes = [8, 128], strides = [1, 1]} : vector<8x512xf32> to vector<8x128xf32>
    %54 = math.tanh %53 : vector<8x128xf32>
    %55 = vector.extract_strided_slice %40 {offsets = [0, 384], sizes = [8, 128], strides = [1, 1]} : vector<8x512xf32> to vector<8x128xf32>
    %56 = arith.negf %55 : vector<8x128xf32>
    %57 = math.exp %56 : vector<8x128xf32>
    %cst_15 = arith.constant 1.000000e+00 : f32
    %58 = vector.broadcast %cst_15 : f32 to vector<8x128xf32>
    %59 = arith.addf %58, %57 : vector<8x128xf32>
    %60 = arith.divf %58, %59 : vector<8x128xf32>
    %61 = arith.mulf %52, %31 : vector<8x128xf32>
    %62 = arith.mulf %46, %54 : vector<8x128xf32>
    %63 = arith.addf %61, %62 : vector<8x128xf32>
    %64 = math.tanh %63 : vector<8x128xf32>
    %65 = arith.mulf %60, %64 : vector<8x128xf32>
    %c2_i32 = arith.constant 2 : i32
    %66 = arith.index_cast %c2_i32 : i32 to index
    %c0_16 = arith.constant 0 : index
    %c0_17 = arith.constant 0 : index
    %67 = vector.load %arg0[%66, %c0_16, %c0_17] : memref<8x8x512xf32, #tpu.memory_space<vmem>>, vector<1x8x512xf32>
    %68 = vector.shape_cast %67 : vector<1x8x512xf32> to vector<8x512xf32>
    %69 = arith.truncf %65 : vector<8x128xf32> to vector<8x128xbf16>
    %c0_18 = arith.constant 0 : index
    %c0_19 = arith.constant 0 : index
    %70 = vector.load %arg1[%c0_18, %c0_19] : memref<128x512xbf16, #tpu.memory_space<vmem>>, vector<128x512xbf16>
    %cst_20 = arith.constant dense<0.000000e+00> : vector<8x512xf32>
    %71 = tpu.matmul %69, %70, %cst_20 {dimension_numbers = #tpu.dot_dimension_numbers<[1], [0], [0], [1], [0, 0, 1, 1], [], []>} : vector<8x128xbf16>, vector<128x512xbf16>, vector<8x512xf32> -> vector<8x512xf32>
    %72 = arith.addf %68, %71 : vector<8x512xf32>
    %73 = vector.extract_strided_slice %72 {offsets = [0, 0], sizes = [8, 128], strides = [1, 1]} : vector<8x512xf32> to vector<8x128xf32>
    %74 = arith.negf %73 : vector<8x128xf32>
    %75 = math.exp %74 : vector<8x128xf32>
    %cst_21 = arith.constant 1.000000e+00 : f32
    %76 = vector.broadcast %cst_21 : f32 to vector<8x128xf32>
    %77 = arith.addf %76, %75 : vector<8x128xf32>
    %78 = arith.divf %76, %77 : vector<8x128xf32>
    %79 = vector.extract_strided_slice %72 {offsets = [0, 128], sizes = [8, 128], strides = [1, 1]} : vector<8x512xf32> to vector<8x128xf32>
    %80 = arith.negf %79 : vector<8x128xf32>
    %81 = math.exp %80 : vector<8x128xf32>
    %cst_22 = arith.constant 1.000000e+00 : f32
    %82 = vector.broadcast %cst_22 : f32 to vector<8x128xf32>
    %83 = arith.addf %82, %81 : vector<8x128xf32>
    %84 = arith.divf %82, %83 : vector<8x128xf32>
    %85 = vector.extract_strided_slice %72 {offsets = [0, 256], sizes = [8, 128], strides = [1, 1]} : vector<8x512xf32> to vector<8x128xf32>
    %86 = math.tanh %85 : vector<8x128xf32>
    %87 = vector.extract_strided_slice %72 {offsets = [0, 384], sizes = [8, 128], strides = [1, 1]} : vector<8x512xf32> to vector<8x128xf32>
    %88 = arith.negf %87 : vector<8x128xf32>
    %89 = math.exp %88 : vector<8x128xf32>
    %cst_23 = arith.constant 1.000000e+00 : f32
    %90 = vector.broadcast %cst_23 : f32 to vector<8x128xf32>
    %91 = arith.addf %90, %89 : vector<8x128xf32>
    %92 = arith.divf %90, %91 : vector<8x128xf32>
    %93 = arith.mulf %84, %63 : vector<8x128xf32>
    %94 = arith.mulf %78, %86 : vector<8x128xf32>
    %95 = arith.addf %93, %94 : vector<8x128xf32>
    %96 = math.tanh %95 : vector<8x128xf32>
    %97 = arith.mulf %92, %96 : vector<8x128xf32>
    %c3_i32 = arith.constant 3 : i32
    %98 = arith.index_cast %c3_i32 : i32 to index
    %c0_24 = arith.constant 0 : index
    %c0_25 = arith.constant 0 : index
    %99 = vector.load %arg0[%98, %c0_24, %c0_25] : memref<8x8x512xf32, #tpu.memory_space<vmem>>, vector<1x8x512xf32>
    %100 = vector.shape_cast %99 : vector<1x8x512xf32> to vector<8x512xf32>
    %101 = arith.truncf %97 : vector<8x128xf32> to vector<8x128xbf16>
    %c0_26 = arith.constant 0 : index
    %c0_27 = arith.constant 0 : index
    %102 = vector.load %arg1[%c0_26, %c0_27] : memref<128x512xbf16, #tpu.memory_space<vmem>>, vector<128x512xbf16>
    %cst_28 = arith.constant dense<0.000000e+00> : vector<8x512xf32>
    %103 = tpu.matmul %101, %102, %cst_28 {dimension_numbers = #tpu.dot_dimension_numbers<[1], [0], [0], [1], [0, 0, 1, 1], [], []>} : vector<8x128xbf16>, vector<128x512xbf16>, vector<8x512xf32> -> vector<8x512xf32>
    %104 = arith.addf %100, %103 : vector<8x512xf32>
    %105 = vector.extract_strided_slice %104 {offsets = [0, 0], sizes = [8, 128], strides = [1, 1]} : vector<8x512xf32> to vector<8x128xf32>
    %106 = arith.negf %105 : vector<8x128xf32>
    %107 = math.exp %106 : vector<8x128xf32>
    %cst_29 = arith.constant 1.000000e+00 : f32
    %108 = vector.broadcast %cst_29 : f32 to vector<8x128xf32>
    %109 = arith.addf %108, %107 : vector<8x128xf32>
    %110 = arith.divf %108, %109 : vector<8x128xf32>
    %111 = vector.extract_strided_slice %104 {offsets = [0, 128], sizes = [8, 128], strides = [1, 1]} : vector<8x512xf32> to vector<8x128xf32>
    %112 = arith.negf %111 : vector<8x128xf32>
    %113 = math.exp %112 : vector<8x128xf32>
    %cst_30 = arith.constant 1.000000e+00 : f32
    %114 = vector.broadcast %cst_30 : f32 to vector<8x128xf32>
    %115 = arith.addf %114, %113 : vector<8x128xf32>
    %116 = arith.divf %114, %115 : vector<8x128xf32>
    %117 = vector.extract_strided_slice %104 {offsets = [0, 256], sizes = [8, 128], strides = [1, 1]} : vector<8x512xf32> to vector<8x128xf32>
    %118 = math.tanh %117 : vector<8x128xf32>
    %119 = vector.extract_strided_slice %104 {offsets = [0, 384], sizes = [8, 128], strides = [1, 1]} : vector<8x512xf32> to vector<8x128xf32>
    %120 = arith.negf %119 : vector<8x128xf32>
    %121 = math.exp %120 : vector<8x128xf32>
    %cst_31 = arith.constant 1.000000e+00 : f32
    %122 = vector.broadcast %cst_31 : f32 to vector<8x128xf32>
    %123 = arith.addf %122, %121 : vector<8x128xf32>
    %124 = arith.divf %122, %123 : vector<8x128xf32>
    %125 = arith.mulf %116, %95 : vector<8x128xf32>
    %126 = arith.mulf %110, %118 : vector<8x128xf32>
    %127 = arith.addf %125, %126 : vector<8x128xf32>
    %128 = math.tanh %127 : vector<8x128xf32>
    %129 = arith.mulf %124, %128 : vector<8x128xf32>
    %c4_i32 = arith.constant 4 : i32
    %130 = arith.index_cast %c4_i32 : i32 to index
    %c0_32 = arith.constant 0 : index
    %c0_33 = arith.constant 0 : index
    %131 = vector.load %arg0[%130, %c0_32, %c0_33] : memref<8x8x512xf32, #tpu.memory_space<vmem>>, vector<1x8x512xf32>
    %132 = vector.shape_cast %131 : vector<1x8x512xf32> to vector<8x512xf32>
    %133 = arith.truncf %129 : vector<8x128xf32> to vector<8x128xbf16>
    %c0_34 = arith.constant 0 : index
    %c0_35 = arith.constant 0 : index
    %134 = vector.load %arg1[%c0_34, %c0_35] : memref<128x512xbf16, #tpu.memory_space<vmem>>, vector<128x512xbf16>
    %cst_36 = arith.constant dense<0.000000e+00> : vector<8x512xf32>
    %135 = tpu.matmul %133, %134, %cst_36 {dimension_numbers = #tpu.dot_dimension_numbers<[1], [0], [0], [1], [0, 0, 1, 1], [], []>} : vector<8x128xbf16>, vector<128x512xbf16>, vector<8x512xf32> -> vector<8x512xf32>
    %136 = arith.addf %132, %135 : vector<8x512xf32>
    %137 = vector.extract_strided_slice %136 {offsets = [0, 0], sizes = [8, 128], strides = [1, 1]} : vector<8x512xf32> to vector<8x128xf32>
    %138 = arith.negf %137 : vector<8x128xf32>
    %139 = math.exp %138 : vector<8x128xf32>
    %cst_37 = arith.constant 1.000000e+00 : f32
    %140 = vector.broadcast %cst_37 : f32 to vector<8x128xf32>
    %141 = arith.addf %140, %139 : vector<8x128xf32>
    %142 = arith.divf %140, %141 : vector<8x128xf32>
    %143 = vector.extract_strided_slice %136 {offsets = [0, 128], sizes = [8, 128], strides = [1, 1]} : vector<8x512xf32> to vector<8x128xf32>
    %144 = arith.negf %143 : vector<8x128xf32>
    %145 = math.exp %144 : vector<8x128xf32>
    %cst_38 = arith.constant 1.000000e+00 : f32
    %146 = vector.broadcast %cst_38 : f32 to vector<8x128xf32>
    %147 = arith.addf %146, %145 : vector<8x128xf32>
    %148 = arith.divf %146, %147 : vector<8x128xf32>
    %149 = vector.extract_strided_slice %136 {offsets = [0, 256], sizes = [8, 128], strides = [1, 1]} : vector<8x512xf32> to vector<8x128xf32>
    %150 = math.tanh %149 : vector<8x128xf32>
    %151 = vector.extract_strided_slice %136 {offsets = [0, 384], sizes = [8, 128], strides = [1, 1]} : vector<8x512xf32> to vector<8x128xf32>
    %152 = arith.negf %151 : vector<8x128xf32>
    %153 = math.exp %152 : vector<8x128xf32>
    %cst_39 = arith.constant 1.000000e+00 : f32
    %154 = vector.broadcast %cst_39 : f32 to vector<8x128xf32>
    %155 = arith.addf %154, %153 : vector<8x128xf32>
    %156 = arith.divf %154, %155 : vector<8x128xf32>
    %157 = arith.mulf %148, %127 : vector<8x128xf32>
    %158 = arith.mulf %142, %150 : vector<8x128xf32>
    %159 = arith.addf %157, %158 : vector<8x128xf32>
    %160 = math.tanh %159 : vector<8x128xf32>
    %161 = arith.mulf %156, %160 : vector<8x128xf32>
    %c5_i32 = arith.constant 5 : i32
    %162 = arith.index_cast %c5_i32 : i32 to index
    %c0_40 = arith.constant 0 : index
    %c0_41 = arith.constant 0 : index
    %163 = vector.load %arg0[%162, %c0_40, %c0_41] : memref<8x8x512xf32, #tpu.memory_space<vmem>>, vector<1x8x512xf32>
    %164 = vector.shape_cast %163 : vector<1x8x512xf32> to vector<8x512xf32>
    %165 = arith.truncf %161 : vector<8x128xf32> to vector<8x128xbf16>
    %c0_42 = arith.constant 0 : index
    %c0_43 = arith.constant 0 : index
    %166 = vector.load %arg1[%c0_42, %c0_43] : memref<128x512xbf16, #tpu.memory_space<vmem>>, vector<128x512xbf16>
    %cst_44 = arith.constant dense<0.000000e+00> : vector<8x512xf32>
    %167 = tpu.matmul %165, %166, %cst_44 {dimension_numbers = #tpu.dot_dimension_numbers<[1], [0], [0], [1], [0, 0, 1, 1], [], []>} : vector<8x128xbf16>, vector<128x512xbf16>, vector<8x512xf32> -> vector<8x512xf32>
    %168 = arith.addf %164, %167 : vector<8x512xf32>
    %169 = vector.extract_strided_slice %168 {offsets = [0, 0], sizes = [8, 128], strides = [1, 1]} : vector<8x512xf32> to vector<8x128xf32>
    %170 = arith.negf %169 : vector<8x128xf32>
    %171 = math.exp %170 : vector<8x128xf32>
    %cst_45 = arith.constant 1.000000e+00 : f32
    %172 = vector.broadcast %cst_45 : f32 to vector<8x128xf32>
    %173 = arith.addf %172, %171 : vector<8x128xf32>
    %174 = arith.divf %172, %173 : vector<8x128xf32>
    %175 = vector.extract_strided_slice %168 {offsets = [0, 128], sizes = [8, 128], strides = [1, 1]} : vector<8x512xf32> to vector<8x128xf32>
    %176 = arith.negf %175 : vector<8x128xf32>
    %177 = math.exp %176 : vector<8x128xf32>
    %cst_46 = arith.constant 1.000000e+00 : f32
    %178 = vector.broadcast %cst_46 : f32 to vector<8x128xf32>
    %179 = arith.addf %178, %177 : vector<8x128xf32>
    %180 = arith.divf %178, %179 : vector<8x128xf32>
    %181 = vector.extract_strided_slice %168 {offsets = [0, 256], sizes = [8, 128], strides = [1, 1]} : vector<8x512xf32> to vector<8x128xf32>
    %182 = math.tanh %181 : vector<8x128xf32>
    %183 = vector.extract_strided_slice %168 {offsets = [0, 384], sizes = [8, 128], strides = [1, 1]} : vector<8x512xf32> to vector<8x128xf32>
    %184 = arith.negf %183 : vector<8x128xf32>
    %185 = math.exp %184 : vector<8x128xf32>
    %cst_47 = arith.constant 1.000000e+00 : f32
    %186 = vector.broadcast %cst_47 : f32 to vector<8x128xf32>
    %187 = arith.addf %186, %185 : vector<8x128xf32>
    %188 = arith.divf %186, %187 : vector<8x128xf32>
    %189 = arith.mulf %180, %159 : vector<8x128xf32>
    %190 = arith.mulf %174, %182 : vector<8x128xf32>
    %191 = arith.addf %189, %190 : vector<8x128xf32>
    %192 = math.tanh %191 : vector<8x128xf32>
    %193 = arith.mulf %188, %192 : vector<8x128xf32>
    %c6_i32 = arith.constant 6 : i32
    %194 = arith.index_cast %c6_i32 : i32 to index
    %c0_48 = arith.constant 0 : index
    %c0_49 = arith.constant 0 : index
    %195 = vector.load %arg0[%194, %c0_48, %c0_49] : memref<8x8x512xf32, #tpu.memory_space<vmem>>, vector<1x8x512xf32>
    %196 = vector.shape_cast %195 : vector<1x8x512xf32> to vector<8x512xf32>
    %197 = arith.truncf %193 : vector<8x128xf32> to vector<8x128xbf16>
    %c0_50 = arith.constant 0 : index
    %c0_51 = arith.constant 0 : index
    %198 = vector.load %arg1[%c0_50, %c0_51] : memref<128x512xbf16, #tpu.memory_space<vmem>>, vector<128x512xbf16>
    %cst_52 = arith.constant dense<0.000000e+00> : vector<8x512xf32>
    %199 = tpu.matmul %197, %198, %cst_52 {dimension_numbers = #tpu.dot_dimension_numbers<[1], [0], [0], [1], [0, 0, 1, 1], [], []>} : vector<8x128xbf16>, vector<128x512xbf16>, vector<8x512xf32> -> vector<8x512xf32>
    %200 = arith.addf %196, %199 : vector<8x512xf32>
    %201 = vector.extract_strided_slice %200 {offsets = [0, 0], sizes = [8, 128], strides = [1, 1]} : vector<8x512xf32> to vector<8x128xf32>
    %202 = arith.negf %201 : vector<8x128xf32>
    %203 = math.exp %202 : vector<8x128xf32>
    %cst_53 = arith.constant 1.000000e+00 : f32
    %204 = vector.broadcast %cst_53 : f32 to vector<8x128xf32>
    %205 = arith.addf %204, %203 : vector<8x128xf32>
    %206 = arith.divf %204, %205 : vector<8x128xf32>
    %207 = vector.extract_strided_slice %200 {offsets = [0, 128], sizes = [8, 128], strides = [1, 1]} : vector<8x512xf32> to vector<8x128xf32>
    %208 = arith.negf %207 : vector<8x128xf32>
    %209 = math.exp %208 : vector<8x128xf32>
    %cst_54 = arith.constant 1.000000e+00 : f32
    %210 = vector.broadcast %cst_54 : f32 to vector<8x128xf32>
    %211 = arith.addf %210, %209 : vector<8x128xf32>
    %212 = arith.divf %210, %211 : vector<8x128xf32>
    %213 = vector.extract_strided_slice %200 {offsets = [0, 256], sizes = [8, 128], strides = [1, 1]} : vector<8x512xf32> to vector<8x128xf32>
    %214 = math.tanh %213 : vector<8x128xf32>
    %215 = vector.extract_strided_slice %200 {offsets = [0, 384], sizes = [8, 128], strides = [1, 1]} : vector<8x512xf32> to vector<8x128xf32>
    %216 = arith.negf %215 : vector<8x128xf32>
    %217 = math.exp %216 : vector<8x128xf32>
    %cst_55 = arith.constant 1.000000e+00 : f32
    %218 = vector.broadcast %cst_55 : f32 to vector<8x128xf32>
    %219 = arith.addf %218, %217 : vector<8x128xf32>
    %220 = arith.divf %218, %219 : vector<8x128xf32>
    %221 = arith.mulf %212, %191 : vector<8x128xf32>
    %222 = arith.mulf %206, %214 : vector<8x128xf32>
    %223 = arith.addf %221, %222 : vector<8x128xf32>
    %224 = math.tanh %223 : vector<8x128xf32>
    %225 = arith.mulf %220, %224 : vector<8x128xf32>
    %c7_i32 = arith.constant 7 : i32
    %226 = arith.index_cast %c7_i32 : i32 to index
    %c0_56 = arith.constant 0 : index
    %c0_57 = arith.constant 0 : index
    %227 = vector.load %arg0[%226, %c0_56, %c0_57] : memref<8x8x512xf32, #tpu.memory_space<vmem>>, vector<1x8x512xf32>
    %228 = vector.shape_cast %227 : vector<1x8x512xf32> to vector<8x512xf32>
    %229 = arith.truncf %225 : vector<8x128xf32> to vector<8x128xbf16>
    %c0_58 = arith.constant 0 : index
    %c0_59 = arith.constant 0 : index
    %230 = vector.load %arg1[%c0_58, %c0_59] : memref<128x512xbf16, #tpu.memory_space<vmem>>, vector<128x512xbf16>
    %cst_60 = arith.constant dense<0.000000e+00> : vector<8x512xf32>
    %231 = tpu.matmul %229, %230, %cst_60 {dimension_numbers = #tpu.dot_dimension_numbers<[1], [0], [0], [1], [0, 0, 1, 1], [], []>} : vector<8x128xbf16>, vector<128x512xbf16>, vector<8x512xf32> -> vector<8x512xf32>
    %232 = arith.addf %228, %231 : vector<8x512xf32>
    %233 = vector.extract_strided_slice %232 {offsets = [0, 0], sizes = [8, 128], strides = [1, 1]} : vector<8x512xf32> to vector<8x128xf32>
    %234 = arith.negf %233 : vector<8x128xf32>
    %235 = math.exp %234 : vector<8x128xf32>
    %cst_61 = arith.constant 1.000000e+00 : f32
    %236 = vector.broadcast %cst_61 : f32 to vector<8x128xf32>
    %237 = arith.addf %236, %235 : vector<8x128xf32>
    %238 = arith.divf %236, %237 : vector<8x128xf32>
    %239 = vector.extract_strided_slice %232 {offsets = [0, 128], sizes = [8, 128], strides = [1, 1]} : vector<8x512xf32> to vector<8x128xf32>
    %240 = arith.negf %239 : vector<8x128xf32>
    %241 = math.exp %240 : vector<8x128xf32>
    %cst_62 = arith.constant 1.000000e+00 : f32
    %242 = vector.broadcast %cst_62 : f32 to vector<8x128xf32>
    %243 = arith.addf %242, %241 : vector<8x128xf32>
    %244 = arith.divf %242, %243 : vector<8x128xf32>
    %245 = vector.extract_strided_slice %232 {offsets = [0, 256], sizes = [8, 128], strides = [1, 1]} : vector<8x512xf32> to vector<8x128xf32>
    %246 = math.tanh %245 : vector<8x128xf32>
    %247 = vector.extract_strided_slice %232 {offsets = [0, 384], sizes = [8, 128], strides = [1, 1]} : vector<8x512xf32> to vector<8x128xf32>
    %248 = arith.negf %247 : vector<8x128xf32>
    %249 = math.exp %248 : vector<8x128xf32>
    %cst_63 = arith.constant 1.000000e+00 : f32
    %250 = vector.broadcast %cst_63 : f32 to vector<8x128xf32>
    %251 = arith.addf %250, %249 : vector<8x128xf32>
    %252 = arith.divf %250, %251 : vector<8x128xf32>
    %253 = arith.mulf %244, %223 : vector<8x128xf32>
    %254 = arith.mulf %238, %246 : vector<8x128xf32>
    %255 = arith.addf %253, %254 : vector<8x128xf32>
    %256 = math.tanh %255 : vector<8x128xf32>
    %257 = arith.mulf %252, %256 : vector<8x128xf32>
    %c8_i32 = arith.constant 8 : i32
    %c0_64 = arith.constant 0 : index
    %c0_65 = arith.constant 0 : index
    %258 = vector.load %arg2[%c0_64, %c0_65] : memref<128x128xf32, #tpu.memory_space<vmem>>, vector<128x128xf32>
    %cst_66 = arith.constant dense<0.000000e+00> : vector<8x128xf32>
    %259 = tpu.matmul %257, %258, %cst_66 {dimension_numbers = #tpu.dot_dimension_numbers<[1], [0], [0], [1], [0, 0, 1, 1], [], []>} : vector<8x128xf32>, vector<128x128xf32>, vector<8x128xf32> -> vector<8x128xf32>
    %c0_67 = arith.constant 0 : index
    %c0_68 = arith.constant 0 : index
    %260 = vector.load %arg3[%c0_67, %c0_68] : memref<1x128xf32, #tpu.memory_space<vmem>>, vector<1x128xf32>
    %261 = vector.broadcast %260 : vector<1x128xf32> to vector<8x128xf32>
    %262 = arith.addf %259, %261 : vector<8x128xf32>
    %c0_69 = arith.constant 0 : index
    %c0_70 = arith.constant 0 : index
    %263 = vector.load %arg4[%c0_69, %c0_70] : memref<8x128xf32, #tpu.memory_space<vmem>>, vector<8x128xf32>
    tpu.vector_store %arg4[%c0_69, %c0_70], %262 {strides = array<i32>} : memref<8x128xf32, #tpu.memory_space<vmem>>, vector<8x128xf32>,
    return
  }
}

</mosaic_0001>

<llo_original>
// kernel: lstm_forward_pallas.1
$region0: #{lstm_forward_pallas.1}
  #allocation0 [shape = 'u32[]', space=smem, size = 0x4, offset = 0x4, fixed_abs, tag = 'smem constant byte address 0x4 - core index']
  #allocation1 [shape = 'u32[144,128]{1,0:T(1,128)}', space=vmem, size = 0x12000, scoped, tag = 'internal scratch']
  %s0 = inlined_call_operand.vmem [shape: f32[8,8,512], index: 0, kind: input, shape index: {}]
  %s1 = inlined_call_operand.vmem [shape: bf16[128,512], index: 1, kind: input, shape index: {}]
  %s2 = inlined_call_operand.hbm [shape: f32[128,128], index: 2, kind: input, shape index: {}]
  %s3 = inlined_call_operand.vmem [shape: f32[1,128], index: 3, kind: input, shape index: {}]
  %s4 = inlined_call_operand.vmem [shape: f32[8,128], index: 4, kind: output, shape index: {}]
  %s5 = sld [smem:[#allocation0]]
  $region30: #{lstm_forward_pallas.1} parent=0
    _
  %s7 = ssub.s32 1, %s5
  %s8 = scalar_select 0, %s7, %s5
  $region1: #{lstm_forward_pallas.1} parent=0
    #allocation2 [shape = 'u8[65536]{0}', space=vmem, size = 0x10000, scoped, tag = 'input window, operand 2, single buffered']
    #allocation3 [shape = 's32[1]{0}', space=sflag, size = 0x4, scoped, tag = 'scoped memory for lstm_forward_pallas.1']
    %9 = vsyncpa [#allocation3], 0
    // Predicated region
    $region2: #{lstm_forward_pallas.1} parent=1 // pred_check
      _
    $region3: #{lstm_forward_pallas.1} parent=1 // pred_check_branch
      %11 = sbr.rel (0) target = $region5
    $region4: #{lstm_forward_pallas.1} parent=1 // pred_region
      _
    $region5: #{lstm_forward_pallas.1} parent=1 // pred_fallthru
      _
    // Predicated region
    $region6: #{lstm_forward_pallas.1} parent=1 // pred_check
      _
    $region7: #{lstm_forward_pallas.1} parent=1 // pred_check_branch
      %13 = sbr.rel (0) target = $region9
    $region8: #{lstm_forward_pallas.1} parent=1 // pred_region
      _
    $region9: #{lstm_forward_pallas.1} parent=1 // pred_fallthru
      _
    // Predicated region
    $region10: #{lstm_forward_pallas.1} parent=1 // pred_check
      _
    $region11: #{lstm_forward_pallas.1} parent=1 // pred_check_branch
      %15 = sbr.rel (0) target = $region13
    $region12: #{lstm_forward_pallas.1} parent=1 // pred_region
      %s17 = ssub.s32 2048, 2048
      %18 = vsyncadd [#allocation3], %s17
      %s19 = sshll.u32 [#allocation2], 4
      %s20 = int_to_ptr.vmem [resolvable:$true] %s19
      %25 = dma.hbm_to_vmem [thread:$0]  %s2, 2048, %s20, [#allocation3], 128, 128, 8
    $region13: #{lstm_forward_pallas.1} parent=1 // pred_fallthru
      _
    // Predicated region
    $region14: #{lstm_forward_pallas.1} parent=1 // pred_check
      _
    $region15: #{lstm_forward_pallas.1} parent=1 // pred_check_branch
      %27 = sbr.rel (0) target = $region17
    $region16: #{lstm_forward_pallas.1} parent=1 // pred_region
      _
    $region17: #{lstm_forward_pallas.1} parent=1 // pred_fallthru
      _
    // Predicated region
    $region18: #{lstm_forward_pallas.1} parent=1 // pred_check
      _
    $region19: #{lstm_forward_pallas.1} parent=1 // pred_check_branch
      %29 = sbr.rel (0) target = $region21
    $region20: #{lstm_forward_pallas.1} parent=1 // pred_region
      %30 = dma.done [#allocation3], 2048
    $region21: #{lstm_forward_pallas.1} parent=1 // pred_fallthru
      _
    %v32 = vld [vmem:[%s0] sm:$0xff]
    %v33 = vld [vmem:[%s0 + $0x8] sm:$0xff]
    %v34 = vld [vmem:[%s0 + $0x10] sm:$0xff]
    %v35 = vld [vmem:[%s0 + $0x18] sm:$0xff]
    %v36 = vld [vmem:[%s1] sm:$0xff]
    %v37 = vld [vmem:[%s1 + $0x8] sm:$0xff]
    %v38 = vld [vmem:[%s1 + $0x10] sm:$0xff]
    %v39 = vld [vmem:[%s1 + $0x18] sm:$0xff]
    %v40 = vld [vmem:[%s1 + $0x20] sm:$0xff]
    %v41 = vld [vmem:[%s1 + $0x28] sm:$0xff]
    %v42 = vld [vmem:[%s1 + $0x30] sm:$0xff]
    %v43 = vld [vmem:[%s1 + $0x38] sm:$0xff]
    %v44 = vld [vmem:[%s1 + $0x40] sm:$0xff]
    %v45 = vld [vmem:[%s1 + $0x48] sm:$0xff]
    %v46 = vld [vmem:[%s1 + $0x50] sm:$0xff]
    %v47 = vld [vmem:[%s1 + $0x58] sm:$0xff]
    %v48 = vld [vmem:[%s1 + $0x60] sm:$0xff]
    %v49 = vld [vmem:[%s1 + $0x68] sm:$0xff]
    %v50 = vld [vmem:[%s1 + $0x70] sm:$0xff]
    %v51 = vld [vmem:[%s1 + $0x78] sm:$0xff]
    %v52 = vld [vmem:[%s1 + $0x80] sm:$0xff]
    %v53 = vld [vmem:[%s1 + $0x88] sm:$0xff]
    %v54 = vld [vmem:[%s1 + $0x90] sm:$0xff]
    %v55 = vld [vmem:[%s1 + $0x98] sm:$0xff]
    %v56 = vld [vmem:[%s1 + $0xa0] sm:$0xff]
    %v57 = vld [vmem:[%s1 + $0xa8] sm:$0xff]
    %v58 = vld [vmem:[%s1 + $0xb0] sm:$0xff]
    %v59 = vld [vmem:[%s1 + $0xb8] sm:$0xff]
    %v60 = vld [vmem:[%s1 + $0xc0] sm:$0xff]
    %v61 = vld [vmem:[%s1 + $0xc8] sm:$0xff]
    %v62 = vld [vmem:[%s1 + $0xd0] sm:$0xff]
    %v63 = vld [vmem:[%s1 + $0xd8] sm:$0xff]
    %v64 = vld [vmem:[%s1 + $0xe0] sm:$0xff]
    %v65 = vld [vmem:[%s1 + $0xe8] sm:$0xff]
    %v66 = vld [vmem:[%s1 + $0xf0] sm:$0xff]
    %v67 = vld [vmem:[%s1 + $0xf8] sm:$0xff]
    %v100 = vunpack.c.l.b16 %v36
    %v101 = vunpack.c.h.b16 %v36
    %v102 = vunpack.c.l.b16 %v37
    %v103 = vunpack.c.h.b16 %v37
    %v104 = vunpack.c.l.b16 %v38
    %v105 = vunpack.c.h.b16 %v38
    %v106 = vunpack.c.l.b16 %v39
    %v107 = vunpack.c.h.b16 %v39
    %v108 = vunpack.c.l.b16 %v40
    %v109 = vunpack.c.h.b16 %v40
    %v110 = vunpack.c.l.b16 %v41
    %v111 = vunpack.c.h.b16 %v41
    %v112 = vunpack.c.l.b16 %v42
    %v113 = vunpack.c.h.b16 %v42
    %v114 = vunpack.c.l.b16 %v43
    %v115 = vunpack.c.h.b16 %v43
    %v116 = vunpack.c.l.b16 %v44
    %v117 = vunpack.c.h.b16 %v44
    %v118 = vunpack.c.l.b16 %v45
    %v119 = vunpack.c.h.b16 %v45
    %v120 = vunpack.c.l.b16 %v46
    %v121 = vunpack.c.h.b16 %v46
    %v122 = vunpack.c.l.b16 %v47
    %v123 = vunpack.c.h.b16 %v47
    %v124 = vunpack.c.l.b16 %v48
    %v125 = vunpack.c.h.b16 %v48
    %v126 = vunpack.c.l.b16 %v49
    %v127 = vunpack.c.h.b16 %v49
    %v128 = vunpack.c.l.b16 %v50
    %v129 = vunpack.c.h.b16 %v50
    %v130 = vunpack.c.l.b16 %v51
    %v131 = vunpack.c.h.b16 %v51
    %v132 = vunpack.c.l.b16 %v52
    %v133 = vunpack.c.h.b16 %v52
    %v134 = vunpack.c.l.b16 %v53
    %v135 = vunpack.c.h.b16 %v53
    %v136 = vunpack.c.l.b16 %v54
    %v137 = vunpack.c.h.b16 %v54
    %v138 = vunpack.c.l.b16 %v55
    %v139 = vunpack.c.h.b16 %v55
    %v140 = vunpack.c.l.b16 %v56
    %v141 = vunpack.c.h.b16 %v56
    %v142 = vunpack.c.l.b16 %v57
    %v143 = vunpack.c.h.b16 %v57
    %v144 = vunpack.c.l.b16 %v58
    %v145 = vunpack.c.h.b16 %v58
    %v146 = vunpack.c.l.b16 %v59
    %v147 = vunpack.c.h.b16 %v59
    %v148 = vunpack.c.l.b16 %v60
    %v149 = vunpack.c.h.b16 %v60
    %v150 = vunpack.c.l.b16 %v61
    %v151 = vunpack.c.h.b16 %v61
    %v152 = vunpack.c.l.b16 %v62
    %v153 = vunpack.c.h.b16 %v62
    %v154 = vunpack.c.l.b16 %v63
    %v155 = vunpack.c.h.b16 %v63
    %v156 = vunpack.c.l.b16 %v64
    %v157 = vunpack.c.h.b16 %v64
    %v158 = vunpack.c.l.b16 %v65
    %v159 = vunpack.c.h.b16 %v65
    %v160 = vunpack.c.l.b16 %v66
    %v161 = vunpack.c.h.b16 %v66
    %v162 = vunpack.c.l.b16 %v67
    %v163 = vunpack.c.h.b16 %v67
    %v164 = vpack.c.b16 %v104, %v100
    %v165 = vpack.c.b16 %v105, %v101
    %v166 = vpack.c.b16 %v106, %v102
    %v167 = vpack.c.b16 %v107, %v103
    %v168 = vpack.c.b16 %v112, %v108
    %v169 = vpack.c.b16 %v113, %v109
    %v170 = vpack.c.b16 %v114, %v110
    %v171 = vpack.c.b16 %v115, %v111
    %v172 = vpack.c.b16 %v120, %v116
    %v173 = vpack.c.b16 %v121, %v117
    %v174 = vpack.c.b16 %v122, %v118
    %v175 = vpack.c.b16 %v123, %v119
    %v176 = vpack.c.b16 %v128, %v124
    %v177 = vpack.c.b16 %v129, %v125
    %v178 = vpack.c.b16 %v130, %v126
    %v179 = vpack.c.b16 %v131, %v127
    %v180 = vpack.c.b16 %v136, %v132
    %v181 = vpack.c.b16 %v137, %v133
    %v182 = vpack.c.b16 %v138, %v134
    %v183 = vpack.c.b16 %v139, %v135
    %v184 = vpack.c.b16 %v144, %v140
    %v185 = vpack.c.b16 %v145, %v141
    %v186 = vpack.c.b16 %v146, %v142
    %v187 = vpack.c.b16 %v147, %v143
    %v188 = vpack.c.b16 %v152, %v148
    %v189 = vpack.c.b16 %v153, %v149
    %v190 = vpack.c.b16 %v154, %v150
    %v191 = vpack.c.b16 %v155, %v151
    %v192 = vpack.c.b16 %v160, %v156
    %v193 = vpack.c.b16 %v161, %v157
    %v194 = vpack.c.b16 %v162, %v158
    %v195 = vpack.c.b16 %v163, %v159
    %228 = vmatprep.subr.bf16.mxu0 %v165
    %229 = vmatpush1.bf16.msra.mxu0 %v164
    %230 = vmatprep.subr.bf16.mxu0 %v169
    %231 = vmatpush1.bf16.msra.mxu0 %v168
    %232 = vmatprep.subr.bf16.mxu0 %v173
    %233 = vmatpush1.bf16.msra.mxu0 %v172
    %234 = vmatprep.subr.bf16.mxu0 %v177
    %235 = vmatpush1.bf16.msra.mxu0 %v176
    %236 = vmatprep.subr.bf16.mxu0 %v181
    %237 = vmatpush1.bf16.msra.mxu0 %v180
    %238 = vmatprep.subr.bf16.mxu0 %v185
    %239 = vmatpush1.bf16.msra.mxu0 %v184
    %240 = vmatprep.subr.bf16.mxu0 %v189
    %241 = vmatpush1.bf16.msra.mxu0 %v188
    %242 = vmatprep.subr.bf16.mxu0 %v193
    %243 = vmatpush1.bf16.msra.mxu0 %v192
    %244 = vmatprep.subr.bf16.mxu0 0
    %245 = vmatpush1.bf16.msra.mxu0 0
    %246 = vmatprep.subr.bf16.mxu0 0
    %247 = vmatpush1.bf16.msra.mxu0 0
    %248 = vmatprep.subr.bf16.mxu0 0
    %249 = vmatpush1.bf16.msra.mxu0 0
    %250 = vmatprep.subr.bf16.mxu0 0
    %251 = vmatpush1.bf16.msra.mxu0 0
    %252 = vmatprep.subr.bf16.mxu0 0
    %253 = vmatpush1.bf16.msra.mxu0 0
    %254 = vmatprep.subr.bf16.mxu0 0
    %255 = vmatpush1.bf16.msra.mxu0 0
    %256 = vmatprep.subr.bf16.mxu0 0
    %257 = vmatpush1.bf16.msra.mxu0 0
    %258 = vmatprep.subr.bf16.mxu0 0
    %259 = vmatpush1.bf16.msra.mxu0 0
    %260 = vmatprep.mubr.bf16.mxu0 0
    %261 = vmatmul.mubr.bf16.gmra.mrb[0].mxu0 0
    %v262 = vpop.f32.mrb[0].mxu0
    %v263 = vadd.f32 0.0, %v262
    %v264 = vpop.f32.mrb[0].mxu0
    %v265 = vadd.f32 0.0, %v264
    %v266 = vpop.f32.mrb[0].mxu0
    %v267 = vpop.f32.mrb[0].mxu0
    %268 = vdwg.mxu0
    %269 = vmatprep.subr.bf16.mxu0 %v167
    %270 = vmatpush1.bf16.msra.mxu0 %v166
    %271 = vmatprep.subr.bf16.mxu0 %v171
    %272 = vmatpush1.bf16.msra.mxu0 %v170
    %273 = vmatprep.subr.bf16.mxu0 %v175
    %274 = vmatpush1.bf16.msra.mxu0 %v174
    %275 = vmatprep.subr.bf16.mxu0 %v179
    %276 = vmatpush1.bf16.msra.mxu0 %v178
    %277 = vmatprep.subr.bf16.mxu0 %v183
    %278 = vmatpush1.bf16.msra.mxu0 %v182
    %279 = vmatprep.subr.bf16.mxu0 %v187
    %280 = vmatpush1.bf16.msra.mxu0 %v186
    %281 = vmatprep.subr.bf16.mxu0 %v191
    %282 = vmatpush1.bf16.msra.mxu0 %v190
    %283 = vmatprep.subr.bf16.mxu0 %v195
    %284 = vmatpush1.bf16.msra.mxu0 %v194
    %285 = vmatprep.subr.bf16.mxu0 0
    %286 = vmatpush1.bf16.msra.mxu0 0
    %287 = vmatprep.subr.bf16.mxu0 0
    %288 = vmatpush1.bf16.msra.mxu0 0
    %289 = vmatprep.subr.bf16.mxu0 0
    %290 = vmatpush1.bf16.msra.mxu0 0
    %291 = vmatprep.subr.bf16.mxu0 0
    %292 = vmatpush1.bf16.msra.mxu0 0
    %293 = vmatprep.subr.bf16.mxu0 0
    %294 = vmatpush1.bf16.msra.mxu0 0
    %295 = vmatprep.subr.bf16.mxu0 0
    %296 = vmatpush1.bf16.msra.mxu0 0
    %297 = vmatprep.subr.bf16.mxu0 0
    %298 = vmatpush1.bf16.msra.mxu0 0
    %299 = vmatprep.subr.bf16.mxu0 0
    %300 = vmatpush1.bf16.msra.mxu0 0
    %301 = vmatprep.mubr.bf16.mxu0 0
    %302 = vmatmul.mubr.bf16.gmra.mrb[0].mxu0 0
    %v303 = vpop.f32.mrb[0].mxu0
    %v304 = vadd.f32 0.0, %v303
    %v305 = vpop.f32.mrb[0].mxu0
    %v306 = vadd.f32 0.0, %v305
    %v307 = vpop.f32.mrb[0].mxu0
    %v308 = vpop.f32.mrb[0].mxu0
    %309 = vdwg.mxu0
    %v310 = vadd.f32 %v32, %v263
    %v311 = vadd.f32 %v33, %v265
    %v312 = vadd.f32 %v34, %v304
    %v313 = vadd.f32 %v35, %v306
    %v314 = vxor.u32 %v310, 2147483648
    %v315 = vmul.f32 %v314, 1.442695
    %v316 = vpow.pop %v315
    %v317 = vadd.f32 %v316, 1.0
    %v318 = vrcp.pop %v317
    %v319 = vmul.f32 1.0, %v318
    %v320 = vxor.u32 %v311, 2147483648
    %v321 = vmul.f32 %v320, 1.442695
    %v322 = vpow.pop %v321
    %v323 = vadd.f32 %v322, 1.0
    %v324 = vrcp.pop %v323
    %v325 = vmul.f32 1.0, %v324
    %v326 = vtanh.pop %v312
    %v327 = vxor.u32 %v313, 2147483648
    %v328 = vmul.f32 %v327, 1.442695
    %v329 = vpow.pop %v328
    %v330 = vadd.f32 %v329, 1.0
    %v331 = vrcp.pop %v330
    %v332 = vmul.f32 1.0, %v331
    %v333 = vmul.f32 %v325, 0.0
    %v334 = vmul.f32 %v319, %v326
    %v335 = vadd.f32 %v333, %v334
    %v336 = vtanh.pop %v335
    %v337 = vmul.f32 %v332, %v336
    %s338 = scalar_lea.vmem %s0, 32
    %v339 = vld [vmem:[%s338] sm:$0xff]
    %v340 = vld [vmem:[%s338 + $0x8] sm:$0xff]
    %v341 = vld [vmem:[%s338 + $0x10] sm:$0xff]
    %v342 = vld [vmem:[%s338 + $0x18] sm:$0xff]
    %v343 = vpack.c.bf16 %v337, %v337
    %344 = vmatprep.subr.bf16.mxu0 %v165
    %345 = vmatpush1.bf16.msra.mxu0 %v164
    %346 = vmatprep.subr.bf16.mxu0 %v169
    %347 = vmatpush1.bf16.msra.mxu0 %v168
    %348 = vmatprep.subr.bf16.mxu0 %v173
    %349 = vmatpush1.bf16.msra.mxu0 %v172
    %350 = vmatprep.subr.bf16.mxu0 %v177
    %351 = vmatpush1.bf16.msra.mxu0 %v176
    %352 = vmatprep.subr.bf16.mxu0 %v181
    %353 = vmatpush1.bf16.msra.mxu0 %v180
    %354 = vmatprep.subr.bf16.mxu0 %v185
    %355 = vmatpush1.bf16.msra.mxu0 %v184
    %356 = vmatprep.subr.bf16.mxu0 %v189
    %357 = vmatpush1.bf16.msra.mxu0 %v188
    %358 = vmatprep.subr.bf16.mxu0 %v193
    %359 = vmatpush1.bf16.msra.mxu0 %v192
    %360 = vmatprep.subr.bf16.mxu0 0
    %361 = vmatpush1.bf16.msra.mxu0 0
    %362 = vmatprep.subr.bf16.mxu0 0
    %363 = vmatpush1.bf16.msra.mxu0 0
    %364 = vmatprep.subr.bf16.mxu0 0
    %365 = vmatpush1.bf16.msra.mxu0 0
    %366 = vmatprep.subr.bf16.mxu0 0
    %367 = vmatpush1.bf16.msra.mxu0 0
    %368 = vmatprep.subr.bf16.mxu0 0
    %369 = vmatpush1.bf16.msra.mxu0 0
    %370 = vmatprep.subr.bf16.mxu0 0
    %371 = vmatpush1.bf16.msra.mxu0 0
    %372 = vmatprep.subr.bf16.mxu0 0
    %373 = vmatpush1.bf16.msra.mxu0 0
    %374 = vmatprep.subr.bf16.mxu0 0
    %375 = vmatpush1.bf16.msra.mxu0 0
    %376 = vmatprep.mubr.bf16.mxu0 0
    %377 = vmatmul.mubr.bf16.gmra.mrb[0].mxu0 %v343
    %v378 = vpop.f32.mrb[0].mxu0
    %v379 = vadd.f32 0.0, %v378
    %v380 = vpop.f32.mrb[0].mxu0
    %v381 = vadd.f32 0.0, %v380
    %v382 = vpop.f32.mrb[0].mxu0
    %v383 = vpop.f32.mrb[0].mxu0
    %384 = vdwg.mxu0
    %385 = vmatprep.subr.bf16.mxu0 %v167
    %386 = vmatpush1.bf16.msra.mxu0 %v166
    %387 = vmatprep.subr.bf16.mxu0 %v171
    %388 = vmatpush1.bf16.msra.mxu0 %v170
    %389 = vmatprep.subr.bf16.mxu0 %v175
    %390 = vmatpush1.bf16.msra.mxu0 %v174
    %391 = vmatprep.subr.bf16.mxu0 %v179
    %392 = vmatpush1.bf16.msra.mxu0 %v178
    %393 = vmatprep.subr.bf16.mxu0 %v183
    %394 = vmatpush1.bf16.msra.mxu0 %v182
    %395 = vmatprep.subr.bf16.mxu0 %v187
    %396 = vmatpush1.bf16.msra.mxu0 %v186
    %397 = vmatprep.subr.bf16.mxu0 %v191
    %398 = vmatpush1.bf16.msra.mxu0 %v190
    %399 = vmatprep.subr.bf16.mxu0 %v195
    %400 = vmatpush1.bf16.msra.mxu0 %v194
    %401 = vmatprep.subr.bf16.mxu0 0
    %402 = vmatpush1.bf16.msra.mxu0 0
    %403 = vmatprep.subr.bf16.mxu0 0
    %404 = vmatpush1.bf16.msra.mxu0 0
    %405 = vmatprep.subr.bf16.mxu0 0
    %406 = vmatpush1.bf16.msra.mxu0 0
    %407 = vmatprep.subr.bf16.mxu0 0
    %408 = vmatpush1.bf16.msra.mxu0 0
    %409 = vmatprep.subr.bf16.mxu0 0
    %410 = vmatpush1.bf16.msra.mxu0 0
    %411 = vmatprep.subr.bf16.mxu0 0
    %412 = vmatpush1.bf16.msra.mxu0 0
    %413 = vmatprep.subr.bf16.mxu0 0
    %414 = vmatpush1.bf16.msra.mxu0 0
    %415 = vmatprep.subr.bf16.mxu0 0
    %416 = vmatpush1.bf16.msra.mxu0 0
    %417 = vmatprep.mubr.bf16.mxu0 0
    %418 = vmatmul.mubr.bf16.gmra.mrb[0].mxu0 %v343
    %v419 = vpop.f32.mrb[0].mxu0
    %v420 = vadd.f32 0.0, %v419
    %v421 = vpop.f32.mrb[0].mxu0
    %v422 = vadd.f32 0.0, %v421
    %v423 = vpop.f32.mrb[0].mxu0
    %v424 = vpop.f32.mrb[0].mxu0
    %425 = vdwg.mxu0
    %v426 = vadd.f32 %v339, %v379
    %v427 = vadd.f32 %v340, %v381
    %v428 = vadd.f32 %v341, %v420
    %v429 = vadd.f32 %v342, %v422
    %v430 = vxor.u32 %v426, 2147483648
    %v431 = vmul.f32 %v430, 1.442695
    %v432 = vpow.pop %v431
    %v433 = vadd.f32 %v432, 1.0
    %v434 = vrcp.pop %v433
    %v435 = vmul.f32 1.0, %v434
    %v436 = vxor.u32 %v427, 2147483648
    %v437 = vmul.f32 %v436, 1.442695
    %v438 = vpow.pop %v437
    %v439 = vadd.f32 %v438, 1.0
    %v440 = vrcp.pop %v439
    %v441 = vmul.f32 1.0, %v440
    %v442 = vtanh.pop %v428
    %v443 = vxor.u32 %v429, 2147483648
    %v444 = vmul.f32 %v443, 1.442695
    %v445 = vpow.pop %v444
    %v446 = vadd.f32 %v445, 1.0
    %v447 = vrcp.pop %v446
    %v448 = vmul.f32 1.0, %v447
    %v449 = vmul.f32 %v441, %v335
    %v450 = vmul.f32 %v435, %v442
    %v451 = vadd.f32 %v449, %v450
    %v452 = vtanh.pop %v451
    %v453 = vmul.f32 %v448, %v452
    %s454 = scalar_lea.vmem %s0, 64
    %v455 = vld [vmem:[%s454] sm:$0xff]
    %v456 = vld [vmem:[%s454 + $0x8] sm:$0xff]
    %v457 = vld [vmem:[%s454 + $0x10] sm:$0xff]
    %v458 = vld [vmem:[%s454 + $0x18] sm:$0xff]
    %v459 = vpack.c.bf16 %v453, %v453
    %460 = vmatprep.subr.bf16.mxu0 %v165
    %461 = vmatpush1.bf16.msra.mxu0 %v164
    %462 = vmatprep.subr.bf16.mxu0 %v169
    %463 = vmatpush1.bf16.msra.mxu0 %v168
    %464 = vmatprep.subr.bf16.mxu0 %v173
    %465 = vmatpush1.bf16.msra.mxu0 %v172
    %466 = vmatprep.subr.bf16.mxu0 %v177
    %467 = vmatpush1.bf16.msra.mxu0 %v176
    %468 = vmatprep.subr.bf16.mxu0 %v181
    %469 = vmatpush1.bf16.msra.mxu0 %v180
    %470 = vmatprep.subr.bf16.mxu0 %v185
    %471 = vmatpush1.bf16.msra.mxu0 %v184
    %472 = vmatprep.subr.bf16.mxu0 %v189
    %473 = vmatpush1.bf16.msra.mxu0 %v188
    %474 = vmatprep.subr.bf16.mxu0 %v193
    %475 = vmatpush1.bf16.msra.mxu0 %v192
    %476 = vmatprep.subr.bf16.mxu0 0
    %477 = vmatpush1.bf16.msra.mxu0 0
    %478 = vmatprep.subr.bf16.mxu0 0
    %479 = vmatpush1.bf16.msra.mxu0 0
    %480 = vmatprep.subr.bf16.mxu0 0
    %481 = vmatpush1.bf16.msra.mxu0 0
    %482 = vmatprep.subr.bf16.mxu0 0
    %483 = vmatpush1.bf16.msra.mxu0 0
    %484 = vmatprep.subr.bf16.mxu0 0
    %485 = vmatpush1.bf16.msra.mxu0 0
    %486 = vmatprep.subr.bf16.mxu0 0
    %487 = vmatpush1.bf16.msra.mxu0 0
    %488 = vmatprep.subr.bf16.mxu0 0
    %489 = vmatpush1.bf16.msra.mxu0 0
    %490 = vmatprep.subr.bf16.mxu0 0
    %491 = vmatpush1.bf16.msra.mxu0 0
    %492 = vmatprep.mubr.bf16.mxu0 0
    %493 = vmatmul.mubr.bf16.gmra.mrb[0].mxu0 %v459
    %v494 = vpop.f32.mrb[0].mxu0
    %v495 = vadd.f32 0.0, %v494
    %v496 = vpop.f32.mrb[0].mxu0
    %v497 = vadd.f32 0.0, %v496
    %v498 = vpop.f32.mrb[0].mxu0
    %v499 = vpop.f32.mrb[0].mxu0
    %500 = vdwg.mxu0
    %501 = vmatprep.subr.bf16.mxu0 %v167
    %502 = vmatpush1.bf16.msra.mxu0 %v166
    %503 = vmatprep.subr.bf16.mxu0 %v171
    %504 = vmatpush1.bf16.msra.mxu0 %v170
    %505 = vmatprep.subr.bf16.mxu0 %v175
    %506 = vmatpush1.bf16.msra.mxu0 %v174
    %507 = vmatprep.subr.bf16.mxu0 %v179
    %508 = vmatpush1.bf16.msra.mxu0 %v178
    %509 = vmatprep.subr.bf16.mxu0 %v183
    %510 = vmatpush1.bf16.msra.mxu0 %v182
    %511 = vmatprep.subr.bf16.mxu0 %v187
    %512 = vmatpush1.bf16.msra.mxu0 %v186
    %513 = vmatprep.subr.bf16.mxu0 %v191
    %514 = vmatpush1.bf16.msra.mxu0 %v190
    %515 = vmatprep.subr.bf16.mxu0 %v195
    %516 = vmatpush1.bf16.msra.mxu0 %v194
    %517 = vmatprep.subr.bf16.mxu0 0
    %518 = vmatpush1.bf16.msra.mxu0 0
    %519 = vmatprep.subr.bf16.mxu0 0
    %520 = vmatpush1.bf16.msra.mxu0 0
    %521 = vmatprep.subr.bf16.mxu0 0
    %522 = vmatpush1.bf16.msra.mxu0 0
    %523 = vmatprep.subr.bf16.mxu0 0
    %524 = vmatpush1.bf16.msra.mxu0 0
    %525 = vmatprep.subr.bf16.mxu0 0
    %526 = vmatpush1.bf16.msra.mxu0 0
    %527 = vmatprep.subr.bf16.mxu0 0
    %528 = vmatpush1.bf16.msra.mxu0 0
    %529 = vmatprep.subr.bf16.mxu0 0
    %530 = vmatpush1.bf16.msra.mxu0 0
    %531 = vmatprep.subr.bf16.mxu0 0
    %532 = vmatpush1.bf16.msra.mxu0 0
    %533 = vmatprep.mubr.bf16.mxu0 0
    %534 = vmatmul.mubr.bf16.gmra.mrb[0].mxu0 %v459
    %v535 = vpop.f32.mrb[0].mxu0
    %v536 = vadd.f32 0.0, %v535
    %v537 = vpop.f32.mrb[0].mxu0
    %v538 = vadd.f32 0.0, %v537
    %v539 = vpop.f32.mrb[0].mxu0
    %v540 = vpop.f32.mrb[0].mxu0
    %541 = vdwg.mxu0
    %v542 = vadd.f32 %v455, %v495
    %v543 = vadd.f32 %v456, %v497
    %v544 = vadd.f32 %v457, %v536
    %v545 = vadd.f32 %v458, %v538
    %v546 = vxor.u32 %v542, 2147483648
    %v547 = vmul.f32 %v546, 1.442695
    %v548 = vpow.pop %v547
    %v549 = vadd.f32 %v548, 1.0
    %v550 = vrcp.pop %v549
    %v551 = vmul.f32 1.0, %v550
    %v552 = vxor.u32 %v543, 2147483648
    %v553 = vmul.f32 %v552, 1.442695
    %v554 = vpow.pop %v553
    %v555 = vadd.f32 %v554, 1.0
    %v556 = vrcp.pop %v555
    %v557 = vmul.f32 1.0, %v556
    %v558 = vtanh.pop %v544
    %v559 = vxor.u32 %v545, 2147483648
    %v560 = vmul.f32 %v559, 1.442695
    %v561 = vpow.pop %v560
    %v562 = vadd.f32 %v561, 1.0
    %v563 = vrcp.pop %v562
    %v564 = vmul.f32 1.0, %v563
    %v565 = vmul.f32 %v557, %v451
    %v566 = vmul.f32 %v551, %v558
    %v567 = vadd.f32 %v565, %v566
    %v568 = vtanh.pop %v567
    %v569 = vmul.f32 %v564, %v568
    %s570 = scalar_lea.vmem %s0, 96
    %v571 = vld [vmem:[%s570] sm:$0xff]
    %v572 = vld [vmem:[%s570 + $0x8] sm:$0xff]
    %v573 = vld [vmem:[%s570 + $0x10] sm:$0xff]
    %v574 = vld [vmem:[%s570 + $0x18] sm:$0xff]
    %v575 = vpack.c.bf16 %v569, %v569
    %576 = vmatprep.subr.bf16.mxu0 %v165
    %577 = vmatpush1.bf16.msra.mxu0 %v164
    %578 = vmatprep.subr.bf16.mxu0 %v169
    %579 = vmatpush1.bf16.msra.mxu0 %v168
    %580 = vmatprep.subr.bf16.mxu0 %v173
    %581 = vmatpush1.bf16.msra.mxu0 %v172
    %582 = vmatprep.subr.bf16.mxu0 %v177
    %583 = vmatpush1.bf16.msra.mxu0 %v176
    %584 = vmatprep.subr.bf16.mxu0 %v181
    %585 = vmatpush1.bf16.msra.mxu0 %v180
    %586 = vmatprep.subr.bf16.mxu0 %v185
    %587 = vmatpush1.bf16.msra.mxu0 %v184
    %588 = vmatprep.subr.bf16.mxu0 %v189
    %589 = vmatpush1.bf16.msra.mxu0 %v188
    %590 = vmatprep.subr.bf16.mxu0 %v193
    %591 = vmatpush1.bf16.msra.mxu0 %v192
    %592 = vmatprep.subr.bf16.mxu0 0
    %593 = vmatpush1.bf16.msra.mxu0 0
    %594 = vmatprep.subr.bf16.mxu0 0
    %595 = vmatpush1.bf16.msra.mxu0 0
    %596 = vmatprep.subr.bf16.mxu0 0
    %597 = vmatpush1.bf16.msra.mxu0 0
    %598 = vmatprep.subr.bf16.mxu0 0
    %599 = vmatpush1.bf16.msra.mxu0 0
    %600 = vmatprep.subr.bf16.mxu0 0
    %601 = vmatpush1.bf16.msra.mxu0 0
    %602 = vmatprep.subr.bf16.mxu0 0
    %603 = vmatpush1.bf16.msra.mxu0 0
    %604 = vmatprep.subr.bf16.mxu0 0
    %605 = vmatpush1.bf16.msra.mxu0 0
    %606 = vmatprep.subr.bf16.mxu0 0
    %607 = vmatpush1.bf16.msra.mxu0 0
    %608 = vmatprep.mubr.bf16.mxu0 0
    %609 = vmatmul.mubr.bf16.gmra.mrb[0].mxu0 %v575
    %v610 = vpop.f32.mrb[0].mxu0
    %v611 = vadd.f32 0.0, %v610
    %v612 = vpop.f32.mrb[0].mxu0
    %v613 = vadd.f32 0.0, %v612
    %v614 = vpop.f32.mrb[0].mxu0
    %v615 = vpop.f32.mrb[0].mxu0
    %616 = vdwg.mxu0
    %617 = vmatprep.subr.bf16.mxu0 %v167
    %618 = vmatpush1.bf16.msra.mxu0 %v166
    %619 = vmatprep.subr.bf16.mxu0 %v171
    %620 = vmatpush1.bf16.msra.mxu0 %v170
    %621 = vmatprep.subr.bf16.mxu0 %v175
    %622 = vmatpush1.bf16.msra.mxu0 %v174
    %623 = vmatprep.subr.bf16.mxu0 %v179
    %624 = vmatpush1.bf16.msra.mxu0 %v178
    %625 = vmatprep.subr.bf16.mxu0 %v183
    %626 = vmatpush1.bf16.msra.mxu0 %v182
    %627 = vmatprep.subr.bf16.mxu0 %v187
    %628 = vmatpush1.bf16.msra.mxu0 %v186
    %629 = vmatprep.subr.bf16.mxu0 %v191
    %630 = vmatpush1.bf16.msra.mxu0 %v190
    %631 = vmatprep.subr.bf16.mxu0 %v195
    %632 = vmatpush1.bf16.msra.mxu0 %v194
    %633 = vmatprep.subr.bf16.mxu0 0
    %634 = vmatpush1.bf16.msra.mxu0 0
    %635 = vmatprep.subr.bf16.mxu0 0
    %636 = vmatpush1.bf16.msra.mxu0 0
    %637 = vmatprep.subr.bf16.mxu0 0
    %638 = vmatpush1.bf16.msra.mxu0 0
    %639 = vmatprep.subr.bf16.mxu0 0
    %640 = vmatpush1.bf16.msra.mxu0 0
    %641 = vmatprep.subr.bf16.mxu0 0
    %642 = vmatpush1.bf16.msra.mxu0 0
    %643 = vmatprep.subr.bf16.mxu0 0
    %644 = vmatpush1.bf16.msra.mxu0 0
    %645 = vmatprep.subr.bf16.mxu0 0
    %646 = vmatpush1.bf16.msra.mxu0 0
    %647 = vmatprep.subr.bf16.mxu0 0
    %648 = vmatpush1.bf16.msra.mxu0 0
    %649 = vmatprep.mubr.bf16.mxu0 0
    %650 = vmatmul.mubr.bf16.gmra.mrb[0].mxu0 %v575
    %v651 = vpop.f32.mrb[0].mxu0
    %v652 = vadd.f32 0.0, %v651
    %v653 = vpop.f32.mrb[0].mxu0
    %v654 = vadd.f32 0.0, %v653
    %v655 = vpop.f32.mrb[0].mxu0
    %v656 = vpop.f32.mrb[0].mxu0
    %657 = vdwg.mxu0
    %v658 = vadd.f32 %v571, %v611
    %v659 = vadd.f32 %v572, %v613
    %v660 = vadd.f32 %v573, %v652
    %v661 = vadd.f32 %v574, %v654
    %v662 = vxor.u32 %v658, 2147483648
    %v663 = vmul.f32 %v662, 1.442695
    %v664 = vpow.pop %v663
    %v665 = vadd.f32 %v664, 1.0
    %v666 = vrcp.pop %v665
    %v667 = vmul.f32 1.0, %v666
    %v668 = vxor.u32 %v659, 2147483648
    %v669 = vmul.f32 %v668, 1.442695
    %v670 = vpow.pop %v669
    %v671 = vadd.f32 %v670, 1.0
    %v672 = vrcp.pop %v671
    %v673 = vmul.f32 1.0, %v672
    %v674 = vtanh.pop %v660
    %v675 = vxor.u32 %v661, 2147483648
    %v676 = vmul.f32 %v675, 1.442695
    %v677 = vpow.pop %v676
    %v678 = vadd.f32 %v677, 1.0
    %v679 = vrcp.pop %v678
    %v680 = vmul.f32 1.0, %v679
    %v681 = vmul.f32 %v673, %v567
    %v682 = vmul.f32 %v667, %v674
    %v683 = vadd.f32 %v681, %v682
    %v684 = vtanh.pop %v683
    %v685 = vmul.f32 %v680, %v684
    %s686 = scalar_lea.vmem %s0, 128
    %v687 = vld [vmem:[%s686] sm:$0xff]
    %v688 = vld [vmem:[%s686 + $0x8] sm:$0xff]
    %v689 = vld [vmem:[%s686 + $0x10] sm:$0xff]
    %v690 = vld [vmem:[%s686 + $0x18] sm:$0xff]
    %v691 = vpack.c.bf16 %v685, %v685
    %692 = vmatprep.subr.bf16.mxu0 %v165
    %693 = vmatpush1.bf16.msra.mxu0 %v164
    %694 = vmatprep.subr.bf16.mxu0 %v169
    %695 = vmatpush1.bf16.msra.mxu0 %v168
    %696 = vmatprep.subr.bf16.mxu0 %v173
    %697 = vmatpush1.bf16.msra.mxu0 %v172
    %698 = vmatprep.subr.bf16.mxu0 %v177
    %699 = vmatpush1.bf16.msra.mxu0 %v176
    %700 = vmatprep.subr.bf16.mxu0 %v181
    %701 = vmatpush1.bf16.msra.mxu0 %v180
    %702 = vmatprep.subr.bf16.mxu0 %v185
    %703 = vmatpush1.bf16.msra.mxu0 %v184
    %704 = vmatprep.subr.bf16.mxu0 %v189
    %705 = vmatpush1.bf16.msra.mxu0 %v188
    %706 = vmatprep.subr.bf16.mxu0 %v193
    %707 = vmatpush1.bf16.msra.mxu0 %v192
    %708 = vmatprep.subr.bf16.mxu0 0
    %709 = vmatpush1.bf16.msra.mxu0 0
    %710 = vmatprep.subr.bf16.mxu0 0
    %711 = vmatpush1.bf16.msra.mxu0 0
    %712 = vmatprep.subr.bf16.mxu0 0
    %713 = vmatpush1.bf16.msra.mxu0 0
    %714 = vmatprep.subr.bf16.mxu0 0
    %715 = vmatpush1.bf16.msra.mxu0 0
    %716 = vmatprep.subr.bf16.mxu0 0
    %717 = vmatpush1.bf16.msra.mxu0 0
    %718 = vmatprep.subr.bf16.mxu0 0
    %719 = vmatpush1.bf16.msra.mxu0 0
    %720 = vmatprep.subr.bf16.mxu0 0
    %721 = vmatpush1.bf16.msra.mxu0 0
    %722 = vmatprep.subr.bf16.mxu0 0
    %723 = vmatpush1.bf16.msra.mxu0 0
    %724 = vmatprep.mubr.bf16.mxu0 0
    %725 = vmatmul.mubr.bf16.gmra.mrb[0].mxu0 %v691
    %v726 = vpop.f32.mrb[0].mxu0
    %v727 = vadd.f32 0.0, %v726
    %v728 = vpop.f32.mrb[0].mxu0
    %v729 = vadd.f32 0.0, %v728
    %v730 = vpop.f32.mrb[0].mxu0
    %v731 = vpop.f32.mrb[0].mxu0
    %732 = vdwg.mxu0
    %733 = vmatprep.subr.bf16.mxu0 %v167
    %734 = vmatpush1.bf16.msra.mxu0 %v166
    %735 = vmatprep.subr.bf16.mxu0 %v171
    %736 = vmatpush1.bf16.msra.mxu0 %v170
    %737 = vmatprep.subr.bf16.mxu0 %v175
    %738 = vmatpush1.bf16.msra.mxu0 %v174
    %739 = vmatprep.subr.bf16.mxu0 %v179
    %740 = vmatpush1.bf16.msra.mxu0 %v178
    %741 = vmatprep.subr.bf16.mxu0 %v183
    %742 = vmatpush1.bf16.msra.mxu0 %v182
    %743 = vmatprep.subr.bf16.mxu0 %v187
    %744 = vmatpush1.bf16.msra.mxu0 %v186
    %745 = vmatprep.subr.bf16.mxu0 %v191
    %746 = vmatpush1.bf16.msra.mxu0 %v190
    %747 = vmatprep.subr.bf16.mxu0 %v195
    %748 = vmatpush1.bf16.msra.mxu0 %v194
    %749 = vmatprep.subr.bf16.mxu0 0
    %750 = vmatpush1.bf16.msra.mxu0 0
    %751 = vmatprep.subr.bf16.mxu0 0
    %752 = vmatpush1.bf16.msra.mxu0 0
    %753 = vmatprep.subr.bf16.mxu0 0
    %754 = vmatpush1.bf16.msra.mxu0 0
    %755 = vmatprep.subr.bf16.mxu0 0
    %756 = vmatpush1.bf16.msra.mxu0 0
    %757 = vmatprep.subr.bf16.mxu0 0
    %758 = vmatpush1.bf16.msra.mxu0 0
    %759 = vmatprep.subr.bf16.mxu0 0
    %760 = vmatpush1.bf16.msra.mxu0 0
    %761 = vmatprep.subr.bf16.mxu0 0
    %762 = vmatpush1.bf16.msra.mxu0 0
    %763 = vmatprep.subr.bf16.mxu0 0
    %764 = vmatpush1.bf16.msra.mxu0 0
    %765 = vmatprep.mubr.bf16.mxu0 0
    %766 = vmatmul.mubr.bf16.gmra.mrb[0].mxu0 %v691
    %v767 = vpop.f32.mrb[0].mxu0
    %v768 = vadd.f32 0.0, %v767
    %v769 = vpop.f32.mrb[0].mxu0
    %v770 = vadd.f32 0.0, %v769
    %v771 = vpop.f32.mrb[0].mxu0
    %v772 = vpop.f32.mrb[0].mxu0
    %773 = vdwg.mxu0
    %v774 = vadd.f32 %v687, %v727
    %v775 = vadd.f32 %v688, %v729
    %v776 = vadd.f32 %v689, %v768
    %v777 = vadd.f32 %v690, %v770
    %v778 = vxor.u32 %v774, 2147483648
    %v779 = vmul.f32 %v778, 1.442695
    %v780 = vpow.pop %v779
    %v781 = vadd.f32 %v780, 1.0
    %v782 = vrcp.pop %v781
    %v783 = vmul.f32 1.0, %v782
    %v784 = vxor.u32 %v775, 2147483648
    %v785 = vmul.f32 %v784, 1.442695
    %v786 = vpow.pop %v785
    %v787 = vadd.f32 %v786, 1.0
    %v788 = vrcp.pop %v787
    %v789 = vmul.f32 1.0, %v788
    %v790 = vtanh.pop %v776
    %v791 = vxor.u32 %v777, 2147483648
    %v792 = vmul.f32 %v791, 1.442695
    %v793 = vpow.pop %v792
    %v794 = vadd.f32 %v793, 1.0
    %v795 = vrcp.pop %v794
    %v796 = vmul.f32 1.0, %v795
    %v797 = vmul.f32 %v789, %v683
    %v798 = vmul.f32 %v783, %v790
    %v799 = vadd.f32 %v797, %v798
    %v800 = vtanh.pop %v799
    %v801 = vmul.f32 %v796, %v800
    %s802 = scalar_lea.vmem %s0, 160
    %v803 = vld [vmem:[%s802] sm:$0xff]
    %v804 = vld [vmem:[%s802 + $0x8] sm:$0xff]
    %v805 = vld [vmem:[%s802 + $0x10] sm:$0xff]
    %v806 = vld [vmem:[%s802 + $0x18] sm:$0xff]
    %v807 = vpack.c.bf16 %v801, %v801
    %808 = vmatprep.subr.bf16.mxu0 %v165
    %809 = vmatpush1.bf16.msra.mxu0 %v164
    %810 = vmatprep.subr.bf16.mxu0 %v169
    %811 = vmatpush1.bf16.msra.mxu0 %v168
    %812 = vmatprep.subr.bf16.mxu0 %v173
    %813 = vmatpush1.bf16.msra.mxu0 %v172
    %814 = vmatprep.subr.bf16.mxu0 %v177
    %815 = vmatpush1.bf16.msra.mxu0 %v176
    %816 = vmatprep.subr.bf16.mxu0 %v181
    %817 = vmatpush1.bf16.msra.mxu0 %v180
    %818 = vmatprep.subr.bf16.mxu0 %v185
    %819 = vmatpush1.bf16.msra.mxu0 %v184
    %820 = vmatprep.subr.bf16.mxu0 %v189
    %821 = vmatpush1.bf16.msra.mxu0 %v188
    %822 = vmatprep.subr.bf16.mxu0 %v193
    %823 = vmatpush1.bf16.msra.mxu0 %v192
    %824 = vmatprep.subr.bf16.mxu0 0
    %825 = vmatpush1.bf16.msra.mxu0 0
    %826 = vmatprep.subr.bf16.mxu0 0
    %827 = vmatpush1.bf16.msra.mxu0 0
    %828 = vmatprep.subr.bf16.mxu0 0
    %829 = vmatpush1.bf16.msra.mxu0 0
    %830 = vmatprep.subr.bf16.mxu0 0
    %831 = vmatpush1.bf16.msra.mxu0 0
    %832 = vmatprep.subr.bf16.mxu0 0
    %833 = vmatpush1.bf16.msra.mxu0 0
    %834 = vmatprep.subr.bf16.mxu0 0
    %835 = vmatpush1.bf16.msra.mxu0 0
    %836 = vmatprep.subr.bf16.mxu0 0
    %837 = vmatpush1.bf16.msra.mxu0 0
    %838 = vmatprep.subr.bf16.mxu0 0
    %839 = vmatpush1.bf16.msra.mxu0 0
    %840 = vmatprep.mubr.bf16.mxu0 0
    %841 = vmatmul.mubr.bf16.gmra.mrb[0].mxu0 %v807
    %v842 = vpop.f32.mrb[0].mxu0
    %v843 = vadd.f32 0.0, %v842
    %v844 = vpop.f32.mrb[0].mxu0
    %v845 = vadd.f32 0.0, %v844
    %v846 = vpop.f32.mrb[0].mxu0
    %v847 = vpop.f32.mrb[0].mxu0
    %848 = vdwg.mxu0
    %849 = vmatprep.subr.bf16.mxu0 %v167
    %850 = vmatpush1.bf16.msra.mxu0 %v166
    %851 = vmatprep.subr.bf16.mxu0 %v171
    %852 = vmatpush1.bf16.msra.mxu0 %v170
    %853 = vmatprep.subr.bf16.mxu0 %v175
    %854 = vmatpush1.bf16.msra.mxu0 %v174
    %855 = vmatprep.subr.bf16.mxu0 %v179
    %856 = vmatpush1.bf16.msra.mxu0 %v178
    %857 = vmatprep.subr.bf16.mxu0 %v183
    %858 = vmatpush1.bf16.msra.mxu0 %v182
    %859 = vmatprep.subr.bf16.mxu0 %v187
    %860 = vmatpush1.bf16.msra.mxu0 %v186
    %861 = vmatprep.subr.bf16.mxu0 %v191
    %862 = vmatpush1.bf16.msra.mxu0 %v190
    %863 = vmatprep.subr.bf16.mxu0 %v195
    %864 = vmatpush1.bf16.msra.mxu0 %v194
    %865 = vmatprep.subr.bf16.mxu0 0
    %866 = vmatpush1.bf16.msra.mxu0 0
    %867 = vmatprep.subr.bf16.mxu0 0
    %868 = vmatpush1.bf16.msra.mxu0 0
    %869 = vmatprep.subr.bf16.mxu0 0
    %870 = vmatpush1.bf16.msra.mxu0 0
    %871 = vmatprep.subr.bf16.mxu0 0
    %872 = vmatpush1.bf16.msra.mxu0 0
    %873 = vmatprep.subr.bf16.mxu0 0
    %874 = vmatpush1.bf16.msra.mxu0 0
    %875 = vmatprep.subr.bf16.mxu0 0
    %876 = vmatpush1.bf16.msra.mxu0 0
    %877 = vmatprep.subr.bf16.mxu0 0
    %878 = vmatpush1.bf16.msra.mxu0 0
    %879 = vmatprep.subr.bf16.mxu0 0
    %880 = vmatpush1.bf16.msra.mxu0 0
    %881 = vmatprep.mubr.bf16.mxu0 0
    %882 = vmatmul.mubr.bf16.gmra.mrb[0].mxu0 %v807
    %v883 = vpop.f32.mrb[0].mxu0
    %v884 = vadd.f32 0.0, %v883
    %v885 = vpop.f32.mrb[0].mxu0
    %v886 = vadd.f32 0.0, %v885
    %v887 = vpop.f32.mrb[0].mxu0
    %v888 = vpop.f32.mrb[0].mxu0
    %889 = vdwg.mxu0
    %v890 = vadd.f32 %v803, %v843
    %v891 = vadd.f32 %v804, %v845
    %v892 = vadd.f32 %v805, %v884
    %v893 = vadd.f32 %v806, %v886
    %v894 = vxor.u32 %v890, 2147483648
    %v895 = vmul.f32 %v894, 1.442695
    %v896 = vpow.pop %v895
    %v897 = vadd.f32 %v896, 1.0
    %v898 = vrcp.pop %v897
    %v899 = vmul.f32 1.0, %v898
    %v900 = vxor.u32 %v891, 2147483648
    %v901 = vmul.f32 %v900, 1.442695
    %v902 = vpow.pop %v901
    %v903 = vadd.f32 %v902, 1.0
    %v904 = vrcp.pop %v903
    %v905 = vmul.f32 1.0, %v904
    %v906 = vtanh.pop %v892
    %v907 = vxor.u32 %v893, 2147483648
    %v908 = vmul.f32 %v907, 1.442695
    %v909 = vpow.pop %v908
    %v910 = vadd.f32 %v909, 1.0
    %v911 = vrcp.pop %v910
    %v912 = vmul.f32 1.0, %v911
    %v913 = vmul.f32 %v905, %v799
    %v914 = vmul.f32 %v899, %v906
    %v915 = vadd.f32 %v913, %v914
    %v916 = vtanh.pop %v915
    %v917 = vmul.f32 %v912, %v916
    %s918 = scalar_lea.vmem %s0, 192
    %v919 = vld [vmem:[%s918] sm:$0xff]
    %v920 = vld [vmem:[%s918 + $0x8] sm:$0xff]
    %v921 = vld [vmem:[%s918 + $0x10] sm:$0xff]
    %v922 = vld [vmem:[%s918 + $0x18] sm:$0xff]
    %v923 = vpack.c.bf16 %v917, %v917
    %924 = vmatprep.subr.bf16.mxu0 %v165
    %925 = vmatpush1.bf16.msra.mxu0 %v164
    %926 = vmatprep.subr.bf16.mxu0 %v169
    %927 = vmatpush1.bf16.msra.mxu0 %v168
    %928 = vmatprep.subr.bf16.mxu0 %v173
    %929 = vmatpush1.bf16.msra.mxu0 %v172
    %930 = vmatprep.subr.bf16.mxu0 %v177
    %931 = vmatpush1.bf16.msra.mxu0 %v176
    %932 = vmatprep.subr.bf16.mxu0 %v181
    %933 = vmatpush1.bf16.msra.mxu0 %v180
    %934 = vmatprep.subr.bf16.mxu0 %v185
    %935 = vmatpush1.bf16.msra.mxu0 %v184
    %936 = vmatprep.subr.bf16.mxu0 %v189
    %937 = vmatpush1.bf16.msra.mxu0 %v188
    %938 = vmatprep.subr.bf16.mxu0 %v193
    %939 = vmatpush1.bf16.msra.mxu0 %v192
    %940 = vmatprep.subr.bf16.mxu0 0
    %941 = vmatpush1.bf16.msra.mxu0 0
    %942 = vmatprep.subr.bf16.mxu0 0
    %943 = vmatpush1.bf16.msra.mxu0 0
    %944 = vmatprep.subr.bf16.mxu0 0
    %945 = vmatpush1.bf16.msra.mxu0 0
    %946 = vmatprep.subr.bf16.mxu0 0
    %947 = vmatpush1.bf16.msra.mxu0 0
    %948 = vmatprep.subr.bf16.mxu0 0
    %949 = vmatpush1.bf16.msra.mxu0 0
    %950 = vmatprep.subr.bf16.mxu0 0
    %951 = vmatpush1.bf16.msra.mxu0 0
    %952 = vmatprep.subr.bf16.mxu0 0
    %953 = vmatpush1.bf16.msra.mxu0 0
    %954 = vmatprep.subr.bf16.mxu0 0
    %955 = vmatpush1.bf16.msra.mxu0 0
    %956 = vmatprep.mubr.bf16.mxu0 0
    %957 = vmatmul.mubr.bf16.gmra.mrb[0].mxu0 %v923
    %v958 = vpop.f32.mrb[0].mxu0
    %v959 = vadd.f32 0.0, %v958
    %v960 = vpop.f32.mrb[0].mxu0
    %v961 = vadd.f32 0.0, %v960
    %v962 = vpop.f32.mrb[0].mxu0
    %v963 = vpop.f32.mrb[0].mxu0
    %964 = vdwg.mxu0
    %965 = vmatprep.subr.bf16.mxu0 %v167
    %966 = vmatpush1.bf16.msra.mxu0 %v166
    %967 = vmatprep.subr.bf16.mxu0 %v171
    %968 = vmatpush1.bf16.msra.mxu0 %v170
    %969 = vmatprep.subr.bf16.mxu0 %v175
    %970 = vmatpush1.bf16.msra.mxu0 %v174
    %971 = vmatprep.subr.bf16.mxu0 %v179
    %972 = vmatpush1.bf16.msra.mxu0 %v178
    %973 = vmatprep.subr.bf16.mxu0 %v183
    %974 = vmatpush1.bf16.msra.mxu0 %v182
    %975 = vmatprep.subr.bf16.mxu0 %v187
    %976 = vmatpush1.bf16.msra.mxu0 %v186
    %977 = vmatprep.subr.bf16.mxu0 %v191
    %978 = vmatpush1.bf16.msra.mxu0 %v190
    %979 = vmatprep.subr.bf16.mxu0 %v195
    %980 = vmatpush1.bf16.msra.mxu0 %v194
    %981 = vmatprep.subr.bf16.mxu0 0
    %982 = vmatpush1.bf16.msra.mxu0 0
    %983 = vmatprep.subr.bf16.mxu0 0
    %984 = vmatpush1.bf16.msra.mxu0 0
    %985 = vmatprep.subr.bf16.mxu0 0
    %986 = vmatpush1.bf16.msra.mxu0 0
    %987 = vmatprep.subr.bf16.mxu0 0
    %988 = vmatpush1.bf16.msra.mxu0 0
    %989 = vmatprep.subr.bf16.mxu0 0
    %990 = vmatpush1.bf16.msra.mxu0 0
    %991 = vmatprep.subr.bf16.mxu0 0
    %992 = vmatpush1.bf16.msra.mxu0 0
    %993 = vmatprep.subr.bf16.mxu0 0
    %994 = vmatpush1.bf16.msra.mxu0 0
    %995 = vmatprep.subr.bf16.mxu0 0
    %996 = vmatpush1.bf16.msra.mxu0 0
    %997 = vmatprep.mubr.bf16.mxu0 0
    %998 = vmatmul.mubr.bf16.gmra.mrb[0].mxu0 %v923
    %v999 = vpop.f32.mrb[0].mxu0
    %v1000 = vadd.f32 0.0, %v999
    %v1001 = vpop.f32.mrb[0].mxu0
    %v1002 = vadd.f32 0.0, %v1001
    %v1003 = vpop.f32.mrb[0].mxu0
    %v1004 = vpop.f32.mrb[0].mxu0
    %1005 = vdwg.mxu0
    %v1006 = vadd.f32 %v919, %v959
    %v1007 = vadd.f32 %v920, %v961
    %v1008 = vadd.f32 %v921, %v1000
    %v1009 = vadd.f32 %v922, %v1002
    %v1010 = vxor.u32 %v1006, 2147483648
    %v1011 = vmul.f32 %v1010, 1.442695
    %v1012 = vpow.pop %v1011
    %v1013 = vadd.f32 %v1012, 1.0
    %v1014 = vrcp.pop %v1013
    %v1015 = vmul.f32 1.0, %v1014
    %v1016 = vxor.u32 %v1007, 2147483648
    %v1017 = vmul.f32 %v1016, 1.442695
    %v1018 = vpow.pop %v1017
    %v1019 = vadd.f32 %v1018, 1.0
    %v1020 = vrcp.pop %v1019
    %v1021 = vmul.f32 1.0, %v1020
    %v1022 = vtanh.pop %v1008
    %v1023 = vxor.u32 %v1009, 2147483648
    %v1024 = vmul.f32 %v1023, 1.442695
    %v1025 = vpow.pop %v1024
    %v1026 = vadd.f32 %v1025, 1.0
    %v1027 = vrcp.pop %v1026
    %v1028 = vmul.f32 1.0, %v1027
    %v1029 = vmul.f32 %v1021, %v915
    %v1030 = vmul.f32 %v1015, %v1022
    %v1031 = vadd.f32 %v1029, %v1030
    %v1032 = vtanh.pop %v1031
    %v1033 = vmul.f32 %v1028, %v1032
    %s1034 = scalar_lea.vmem %s0, 224
    %v1035 = vld [vmem:[%s1034] sm:$0xff]
    %v1036 = vld [vmem:[%s1034 + $0x8] sm:$0xff]
    %v1037 = vld [vmem:[%s1034 + $0x10] sm:$0xff]
    %v1038 = vld [vmem:[%s1034 + $0x18] sm:$0xff]
    %v1039 = vpack.c.bf16 %v1033, %v1033
    %1040 = vmatprep.subr.bf16.mxu0 %v165
    %1041 = vmatpush1.bf16.msra.mxu0 %v164
    %1042 = vmatprep.subr.bf16.mxu0 %v169
    %1043 = vmatpush1.bf16.msra.mxu0 %v168
    %1044 = vmatprep.subr.bf16.mxu0 %v173
    %1045 = vmatpush1.bf16.msra.mxu0 %v172
    %1046 = vmatprep.subr.bf16.mxu0 %v177
    %1047 = vmatpush1.bf16.msra.mxu0 %v176
    %1048 = vmatprep.subr.bf16.mxu0 %v181
    %1049 = vmatpush1.bf16.msra.mxu0 %v180
    %1050 = vmatprep.subr.bf16.mxu0 %v185
    %1051 = vmatpush1.bf16.msra.mxu0 %v184
    %1052 = vmatprep.subr.bf16.mxu0 %v189
    %1053 = vmatpush1.bf16.msra.mxu0 %v188
    %1054 = vmatprep.subr.bf16.mxu0 %v193
    %1055 = vmatpush1.bf16.msra.mxu0 %v192
    %1056 = vmatprep.subr.bf16.mxu0 0
    %1057 = vmatpush1.bf16.msra.mxu0 0
    %1058 = vmatprep.subr.bf16.mxu0 0
    %1059 = vmatpush1.bf16.msra.mxu0 0
    %1060 = vmatprep.subr.bf16.mxu0 0
    %1061 = vmatpush1.bf16.msra.mxu0 0
    %1062 = vmatprep.subr.bf16.mxu0 0
    %1063 = vmatpush1.bf16.msra.mxu0 0
    %1064 = vmatprep.subr.bf16.mxu0 0
    %1065 = vmatpush1.bf16.msra.mxu0 0
    %1066 = vmatprep.subr.bf16.mxu0 0
    %1067 = vmatpush1.bf16.msra.mxu0 0
    %1068 = vmatprep.subr.bf16.mxu0 0
    %1069 = vmatpush1.bf16.msra.mxu0 0
    %1070 = vmatprep.subr.bf16.mxu0 0
    %1071 = vmatpush1.bf16.msra.mxu0 0
    %1072 = vmatprep.mubr.bf16.mxu0 0
    %1073 = vmatmul.mubr.bf16.gmra.mrb[0].mxu0 %v1039
    %v1074 = vpop.f32.mrb[0].mxu0
    %v1075 = vadd.f32 0.0, %v1074
    %v1076 = vpop.f32.mrb[0].mxu0
    %v1077 = vadd.f32 0.0, %v1076
    %v1078 = vpop.f32.mrb[0].mxu0
    %v1079 = vpop.f32.mrb[0].mxu0
    %1080 = vdwg.mxu0
    %1081 = vmatprep.subr.bf16.mxu0 %v167
    %1082 = vmatpush1.bf16.msra.mxu0 %v166
    %1083 = vmatprep.subr.bf16.mxu0 %v171
    %1084 = vmatpush1.bf16.msra.mxu0 %v170
    %1085 = vmatprep.subr.bf16.mxu0 %v175
    %1086 = vmatpush1.bf16.msra.mxu0 %v174
    %1087 = vmatprep.subr.bf16.mxu0 %v179
    %1088 = vmatpush1.bf16.msra.mxu0 %v178
    %1089 = vmatprep.subr.bf16.mxu0 %v183
    %1090 = vmatpush1.bf16.msra.mxu0 %v182
    %1091 = vmatprep.subr.bf16.mxu0 %v187
    %1092 = vmatpush1.bf16.msra.mxu0 %v186
    %1093 = vmatprep.subr.bf16.mxu0 %v191
    %1094 = vmatpush1.bf16.msra.mxu0 %v190
    %1095 = vmatprep.subr.bf16.mxu0 %v195
    %1096 = vmatpush1.bf16.msra.mxu0 %v194
    %1097 = vmatprep.subr.bf16.mxu0 0
    %1098 = vmatpush1.bf16.msra.mxu0 0
    %1099 = vmatprep.subr.bf16.mxu0 0
    %1100 = vmatpush1.bf16.msra.mxu0 0
    %1101 = vmatprep.subr.bf16.mxu0 0
    %1102 = vmatpush1.bf16.msra.mxu0 0
    %1103 = vmatprep.subr.bf16.mxu0 0
    %1104 = vmatpush1.bf16.msra.mxu0 0
    %1105 = vmatprep.subr.bf16.mxu0 0
    %1106 = vmatpush1.bf16.msra.mxu0 0
    %1107 = vmatprep.subr.bf16.mxu0 0
    %1108 = vmatpush1.bf16.msra.mxu0 0
    %1109 = vmatprep.subr.bf16.mxu0 0
    %1110 = vmatpush1.bf16.msra.mxu0 0
    %1111 = vmatprep.subr.bf16.mxu0 0
    %1112 = vmatpush1.bf16.msra.mxu0 0
    %1113 = vmatprep.mubr.bf16.mxu0 0
    %1114 = vmatmul.mubr.bf16.gmra.mrb[0].mxu0 %v1039
    %v1115 = vpop.f32.mrb[0].mxu0
    %v1116 = vadd.f32 0.0, %v1115
    %v1117 = vpop.f32.mrb[0].mxu0
    %v1118 = vadd.f32 0.0, %v1117
    %v1119 = vpop.f32.mrb[0].mxu0
    %v1120 = vpop.f32.mrb[0].mxu0
    %1121 = vdwg.mxu0
    %v1122 = vadd.f32 %v1035, %v1075
    %v1123 = vadd.f32 %v1036, %v1077
    %v1124 = vadd.f32 %v1037, %v1116
    %v1125 = vadd.f32 %v1038, %v1118
    %v1126 = vxor.u32 %v1122, 2147483648
    %v1127 = vmul.f32 %v1126, 1.442695
    %v1128 = vpow.pop %v1127
    %v1129 = vadd.f32 %v1128, 1.0
    %v1130 = vrcp.pop %v1129
    %v1131 = vmul.f32 1.0, %v1130
    %v1132 = vxor.u32 %v1123, 2147483648
    %v1133 = vmul.f32 %v1132, 1.442695
    %v1134 = vpow.pop %v1133
    %v1135 = vadd.f32 %v1134, 1.0
    %v1136 = vrcp.pop %v1135
    %v1137 = vmul.f32 1.0, %v1136
    %v1138 = vtanh.pop %v1124
    %v1139 = vxor.u32 %v1125, 2147483648
    %v1140 = vmul.f32 %v1139, 1.442695
    %v1141 = vpow.pop %v1140
    %v1142 = vadd.f32 %v1141, 1.0
    %v1143 = vrcp.pop %v1142
    %v1144 = vmul.f32 1.0, %v1143
    %v1145 = vmul.f32 %v1137, %v1031
    %v1146 = vmul.f32 %v1131, %v1138
    %v1147 = vadd.f32 %v1145, %v1146
    %v1148 = vtanh.pop %v1147
    %v1149 = vmul.f32 %v1144, %v1148
    %v1150 = vld [vmem:[#allocation2] sm:$0xff]
    %v1151 = vld [vmem:[#allocation2 + $0x8] sm:$0xff]
    %v1152 = vld [vmem:[#allocation2 + $0x10] sm:$0xff]
    %v1153 = vld [vmem:[#allocation2 + $0x18] sm:$0xff]
    %v1154 = vld [vmem:[#allocation2 + $0x20] sm:$0xff]
    %v1155 = vld [vmem:[#allocation2 + $0x28] sm:$0xff]
    %v1156 = vld [vmem:[#allocation2 + $0x30] sm:$0xff]
    %v1157 = vld [vmem:[#allocation2 + $0x38] sm:$0xff]
    %v1158 = vld [vmem:[#allocation2 + $0x40] sm:$0xff]
    %v1159 = vld [vmem:[#allocation2 + $0x48] sm:$0xff]
    %v1160 = vld [vmem:[#allocation2 + $0x50] sm:$0xff]
    %v1161 = vld [vmem:[#allocation2 + $0x58] sm:$0xff]
    %v1162 = vld [vmem:[#allocation2 + $0x60] sm:$0xff]
    %v1163 = vld [vmem:[#allocation2 + $0x68] sm:$0xff]
    %v1164 = vld [vmem:[#allocation2 + $0x70] sm:$0xff]
    %v1165 = vld [vmem:[#allocation2 + $0x78] sm:$0xff]
    %v1166 = vld [vmem:[%s3] sm:$0x1]
    %v1168 = vlaneseq
    %v1169 = vshrl.u32 %v1168, 7
    %v1170 = vsub.s32 0, %v1169
    %v1171 = vrot.slane %v1166, %v1170
    %1173 = vmatprep.subr.mxu0 0.0
    %1174 = vmatpush1.msra.mxu0 %v1150
    %1175 = vmatprep.subr.mxu0 0.0
    %1176 = vmatpush1.msra.mxu0 %v1151
    %1177 = vmatprep.subr.mxu0 0.0
    %1178 = vmatpush1.msra.mxu0 %v1152
    %1179 = vmatprep.subr.mxu0 0.0
    %1180 = vmatpush1.msra.mxu0 %v1153
    %1181 = vmatprep.subr.mxu0 0.0
    %1182 = vmatpush1.msra.mxu0 %v1154
    %1183 = vmatprep.subr.mxu0 0.0
    %1184 = vmatpush1.msra.mxu0 %v1155
    %1185 = vmatprep.subr.mxu0 0.0
    %1186 = vmatpush1.msra.mxu0 %v1156
    %1187 = vmatprep.subr.mxu0 0.0
    %1188 = vmatpush1.msra.mxu0 %v1157
    %1189 = vmatprep.subr.mxu0 0.0
    %1190 = vmatpush1.msra.mxu0 %v1158
    %1191 = vmatprep.subr.mxu0 0.0
    %1192 = vmatpush1.msra.mxu0 %v1159
    %1193 = vmatprep.subr.mxu0 0.0
    %1194 = vmatpush1.msra.mxu0 %v1160
    %1195 = vmatprep.subr.mxu0 0.0
    %1196 = vmatpush1.msra.mxu0 %v1161
    %1197 = vmatprep.subr.mxu0 0.0
    %1198 = vmatpush1.msra.mxu0 %v1162
    %1199 = vmatprep.subr.mxu0 0.0
    %1200 = vmatpush1.msra.mxu0 %v1163
    %1201 = vmatprep.subr.mxu0 0.0
    %1202 = vmatpush1.msra.mxu0 %v1164
    %1203 = vmatprep.subr.mxu0 0.0
    %1204 = vmatpush1.msra.mxu0 %v1165
    %1205 = vmatprep.subr.mxu0 0.0
    %1206 = vmatpush1.msra.mxu0 0.0
    %1207 = vmatprep.subr.mxu0 0.0
    %1208 = vmatpush1.msra.mxu0 0.0
    %1209 = vmatprep.subr.mxu0 0.0
    %1210 = vmatpush1.msra.mxu0 0.0
    %1211 = vmatprep.subr.mxu0 0.0
    %1212 = vmatpush1.msra.mxu0 0.0
    %1213 = vmatprep.subr.mxu0 0.0
    %1214 = vmatpush1.msra.mxu0 0.0
    %1215 = vmatprep.subr.mxu0 0.0
    %1216 = vmatpush1.msra.mxu0 0.0
    %1217 = vmatprep.subr.mxu0 0.0
    %1218 = vmatpush1.msra.mxu0 0.0
    %1219 = vmatprep.subr.mxu0 0.0
    %1220 = vmatpush1.msra.mxu0 0.0
    %1221 = vmatprep.subr.mxu0 0.0
    %1222 = vmatpush1.msra.mxu0 0.0
    %1223 = vmatprep.subr.mxu0 0.0
    %1224 = vmatpush1.msra.mxu0 0.0
    %1225 = vmatprep.subr.mxu0 0.0
    %1226 = vmatpush1.msra.mxu0 0.0
    %1227 = vmatprep.subr.mxu0 0.0
    %1228 = vmatpush1.msra.mxu0 0.0
    %1229 = vmatprep.subr.mxu0 0.0
    %1230 = vmatpush1.msra.mxu0 0.0
    %1231 = vmatprep.subr.mxu0 0.0
    %1232 = vmatpush1.msra.mxu0 0.0
    %1233 = vmatprep.subr.mxu0 0.0
    %1234 = vmatpush1.msra.mxu0 0.0
    %1235 = vmatprep.subr.mxu0 0.0
    %1236 = vmatpush1.msra.mxu0 0.0
    %1237 = vmatprep.mubr.f32.mxu0 0.0
    %1238 = vmatmul.mubr.f32.gmra.mrb[0].mxu0 %v1149
    %v1239 = vpop.f32.mrb[0].mxu0
    %v1240 = vadd.f32 %v1171, %v1239
    %v1241 = vpop.f32.mrb[0].mxu0
    %1242 = vdwg.mxu0
    %1243 = vst [vmem:[%s4] sm:$0xff] %v1240
    // Predicated region
    $region22: #{lstm_forward_pallas.1} parent=1 // pred_check
      _
    $region23: #{lstm_forward_pallas.1} parent=1 // pred_check_branch
      %1245 = sbr.rel (0) target = $region25
    $region24: #{lstm_forward_pallas.1} parent=1 // pred_region
      _
    $region25: #{lstm_forward_pallas.1} parent=1 // pred_fallthru
      _
    // Predicated region
    $region26: #{lstm_forward_pallas.1} parent=1 // pred_check
      _
    $region27: #{lstm_forward_pallas.1} parent=1 // pred_check_branch
      %1247 = sbr.rel (0) target = $region29
    $region28: #{lstm_forward_pallas.1} parent=1 // pred_region
      _
    $region29: #{lstm_forward_pallas.1} parent=1 // pred_fallthru
      _
    %1248 = vsyncpa [#allocation3], 1

</llo_original>
